<compile_context>
chip_gen: v6e
topology: v6e:2x2x1
jax: 0.10.0
libtpu: 0.0.40
codegen_flags: <defaults>
</compile_context>

<pallas_src>
import jax
import jax.numpy as jnp
from jax import lax
from jax.experimental import pallas as pl
from jax.experimental.pallas import tpu as pltpu

N_EMBD = 384          # from the module
BLOCK_SIZE = 256      # causal mask size (only [:T, :T] is ever used)


def _head_kernel(x_ref, wqkv_ref, o_ref):
    # x_ref:    (Bt, T, C)   float32 activations for Bt batch elements
    # wqkv_ref: (C, 3H)      bf16 fused [q*scale | k | v] projection weights
    # o_ref:    (Bt, T, H)
    Bt, T, C = x_ref.shape
    H = o_ref.shape[-1]

    # ---- fused QKV projection (flatten batch into the row axis: one wide
    # (Bt*T, C) x (C, 3H) MXU matmul) ---------------------------------------
    x2 = x_ref[...].reshape(Bt * T, C).astype(jnp.bfloat16)
    w = wqkv_ref[...]                                         # bf16 (C, 3H)
    qkv = jnp.dot(x2, w, preferred_element_type=jnp.float32)  # (Bt*T, 3H) f32
    qkv = qkv.reshape(Bt, T, 3 * H)

    q = qkv[:, :, :H]            # already scaled by 1/sqrt(H) via the weights
    k = qkv[:, :, H:2 * H]
    v = qkv[:, :, 2 * H:]

    # ---- scores: batched q @ k^T without materializing a transpose --------
    wei = lax.dot_general(
        q.astype(jnp.bfloat16), k.astype(jnp.bfloat16),
        dimension_numbers=(((2,), (2,)), ((0,), (0,))),
        preferred_element_type=jnp.float32)                    # (Bt, T, T) f32

    # causal mask: keep only col <= row.  The diagonal is always unmasked, so
    # every row max stays finite and -inf is numerically safe.
    row = lax.broadcasted_iota(jnp.int32, (T, T), 0)
    col = lax.broadcasted_iota(jnp.int32, (T, T), 1)
    wei = jnp.where((col <= row)[None, :, :], wei, -jnp.inf)

    # ---- numerically-stable softmax along last dim (f32 VPU/EUP math) -----
    m = jnp.max(wei, axis=-1, keepdims=True)
    p = jnp.exp(wei - m)
    denom = jnp.sum(p, axis=-1, keepdims=True)
    attn = p * pl.reciprocal(denom, approx=True)

    # dropout -> identity (eval mode)

    # ---- weighted sum of values --------------------------------------------
    out = lax.dot_general(
        attn.astype(jnp.bfloat16), v.astype(jnp.bfloat16),
        dimension_numbers=(((2,), (1,)), ((0,), (0,))),
        preferred_element_type=jnp.float32)                    # (Bt, T, H)

    o_ref[...] = out.astype(o_ref.dtype)


def _pick_batch_block(B, T):
    """Largest divisor of B that (a) keeps the per-step (Bt, T, T) f32 score
    tensor under ~2 MiB (leaves headroom for double-buffered x / out blocks)
    and (b) leaves >= 2 grid steps when B >= 2 so both v7x TensorCores get
    work under dimension_semantics=("parallel",)."""
    cap = max(1, (2 * 1024 * 1024) // max(1, 4 * T * T))
    target = min(cap, B if B < 2 else max(1, B // 2))
    bt = 1
    for d in range(1, B + 1):
        if B % d == 0 and d <= target:
            bt = d
    return bt


def head_forward(x, wk, wq, wv):
    """x: (B, T, C) float32; wk/wq/wv: (C, H) float32 (pre-transposed
    nn.Linear weights, i.e. y = x @ W). Returns (B, T, H) float32."""
    B, T, C = x.shape
    H = wk.shape[1]
    assert T <= BLOCK_SIZE, "T must not exceed block_size"
    assert C == N_EMBD

    # Fold the 1/sqrt(H) attention scale into the query weights and fuse the
    # three projections into a single (C, 3H) bf16 matrix: [q*scale | k | v].
    scale = jnp.float32(H) ** -0.5
    wqkv = jnp.concatenate([wq * scale, wk, wv], axis=1).astype(jnp.bfloat16)

    Bt = _pick_batch_block(B, T)
    grid = (B // Bt,)

    return pl.pallas_call(
        _head_kernel,
        out_shape=jax.ShapeDtypeStruct((B, T, H), x.dtype),
        grid_spec=pltpu.PrefetchScalarGridSpec(
            num_scalar_prefetch=0,
            grid=grid,
            in_specs=[
                # Bt batch elements per grid step (full T and C per block)
                pl.BlockSpec((Bt, T, C), lambda b: (b, 0, 0)),
                # single fused weight window, constant index (loaded once)
                pl.BlockSpec((C, 3 * H), lambda b: (0, 0)),
            ],
            out_specs=pl.BlockSpec((Bt, T, H), lambda b: (b, 0, 0)),
        ),
        compiler_params=pltpu.CompilerParams(
            dimension_semantics=("parallel",),
            vmem_limit_bytes=32 * 1024 * 1024),
    )(x, wqkv)


def head_reference(x, wk, wq, wv):
    """Pure-JAX f32 reference mirroring the PyTorch forward (eval mode)."""
    k = x @ wk
    q = x @ wq
    v = x @ wv
    wei = (q @ jnp.swapaxes(k, -2, -1)) * (k.shape[-1] ** -0.5)
    T = x.shape[1]
    mask = jnp.tril(jnp.ones((T, T), dtype=bool))
    wei = jnp.where(mask, wei, -jnp.inf)
    wei = jax.nn.softmax(wei, axis=-1)
    return wei @ v


if __name__ == "__main__":
    B, T, C = 8, 64, N_EMBD
    head_size = 64

    key = jax.random.PRNGKey(0)
    kx, kk, kq, kv = jax.random.split(key, 4)
    x = jax.random.normal(kx, (B, T, C), dtype=jnp.float32)
    # deterministic "Linear" weights, stored as (in_features, out_features)
    wk = jax.random.normal(kk, (C, head_size), dtype=jnp.float32) * 0.02
    wq = jax.random.normal(kq, (C, head_size), dtype=jnp.float32) * 0.02
    wv = jax.random.normal(kv, (C, head_size), dtype=jnp.float32) * 0.02

    out = head_forward(x, wk, wq, wv)
    out = jax.block_until_ready(out)

    ref = head_reference(x, wk, wq, wv)
    assert out.shape == (B, T, head_size)
    # bf16 MXU operands (f32 accumulation) -> looser tolerance vs f32 reference
    assert jnp.allclose(out, ref, atol=2e-2, rtol=2e-2), "mismatch vs reference"

    print("KERNEL_OK")
</pallas_src>

<mosaic_0001>
module attributes {stable_mosaic.version = 11 : i64} {
  func.func @_head_kernel(%arg0: i32, %arg1: memref<4x64x384xf32, #tpu.memory_space<vmem>>, %arg2: memref<384x192xbf16, #tpu.memory_space<vmem>>, %arg3: memref<4x64x64xf32, #tpu.memory_space<vmem>>) attributes {dimension_semantics = [#tpu.dimension_semantics<parallel>], iteration_bounds = array<i64: 2>, scalar_prefetch = 0 : i64, scratch_operands = 0 : i64, tpu.core_type = #tpu.core_type<tc>, window_params = [{transform_indices = @transform_0, window_bounds = array<i64: 4, 64, 384>}, {pipeline_mode = #tpu.pipeline_mode<synchronous>, transform_indices = @transform_1, window_bounds = array<i64: 384, 192>}, {transform_indices = @transform_2, window_bounds = array<i64: 4, 64, 64>}]} {
    %c0 = arith.constant 0 : index
    %c0_0 = arith.constant 0 : index
    %c0_1 = arith.constant 0 : index
    %0 = vector.load %arg1[%c0, %c0_0, %c0_1] : memref<4x64x384xf32, #tpu.memory_space<vmem>>, vector<4x64x384xf32>
    %1 = vector.shape_cast %0 : vector<4x64x384xf32> to vector<256x384xf32>
    %2 = arith.truncf %1 : vector<256x384xf32> to vector<256x384xbf16>
    %c0_2 = arith.constant 0 : index
    %c0_3 = arith.constant 0 : index
    %3 = vector.load %arg2[%c0_2, %c0_3] : memref<384x192xbf16, #tpu.memory_space<vmem>>, vector<384x192xbf16>
    %cst = arith.constant dense<0.000000e+00> : vector<256x192xf32>
    %4 = tpu.matmul %2, %3, %cst {dimension_numbers = #tpu.dot_dimension_numbers<[1], [0], [0], [1], [0, 0, 1, 1], [], []>} : vector<256x384xbf16>, vector<384x192xbf16>, vector<256x192xf32> -> vector<256x192xf32>
    %5 = vector.shape_cast %4 : vector<256x192xf32> to vector<4x64x192xf32>
    %6 = vector.extract_strided_slice %5 {offsets = [0, 0, 0], sizes = [4, 64, 64], strides = [1, 1, 1]} : vector<4x64x192xf32> to vector<4x64x64xf32>
    %7 = vector.extract_strided_slice %5 {offsets = [0, 0, 64], sizes = [4, 64, 64], strides = [1, 1, 1]} : vector<4x64x192xf32> to vector<4x64x64xf32>
    %8 = vector.extract_strided_slice %5 {offsets = [0, 0, 128], sizes = [4, 64, 64], strides = [1, 1, 1]} : vector<4x64x192xf32> to vector<4x64x64xf32>
    %9 = arith.truncf %6 : vector<4x64x64xf32> to vector<4x64x64xbf16>
    %10 = arith.truncf %7 : vector<4x64x64xf32> to vector<4x64x64xbf16>
    %cst_4 = arith.constant dense<0.000000e+00> : vector<4x64x64xf32>
    %11 = tpu.matmul %9, %10, %cst_4 {dimension_numbers = #tpu.dot_dimension_numbers<[2], [2], [1], [1], [0, 0, 0, 1, 1, 1], [0], [0]>} : vector<4x64x64xbf16>, vector<4x64x64xbf16>, vector<4x64x64xf32> -> vector<4x64x64xf32>
    %12 = tpu.iota {dimensions = array<i32: 0>} : vector<64x64xi32>
    %13 = tpu.iota {dimensions = array<i32: 1>} : vector<64x64xi32>
    %14 = arith.cmpi sle, %13, %12 : vector<64x64xi32>
    %15 = vector.shape_cast %14 : vector<64x64xi1> to vector<1x64x64xi1>
    %cst_5 = arith.constant 0xFF800000 : f32
    %16 = vector.shape_cast %15 : vector<1x64x64xi1> to vector<1x64x64xi1>
    %17 = vector.broadcast %16 : vector<1x64x64xi1> to vector<4x64x64xi1>
    %18 = vector.broadcast %cst_5 : f32 to vector<4x64x64xf32>
    %19 = arith.select %17, %11, %18 : vector<4x64x64xi1>, vector<4x64x64xf32>
    %cst_6 = arith.constant dense<0xFF800000> : vector<4x64xf32>
    %20 = vector.multi_reduction <maximumf>, %19, %cst_6 [2] : vector<4x64x64xf32> to vector<4x64xf32>
    %21 = vector.shape_cast %20 : vector<4x64xf32> to vector<4x64x1xf32>
    %22 = vector.broadcast %21 : vector<4x64x1xf32> to vector<4x64x64xf32>
    %23 = arith.subf %19, %22 : vector<4x64x64xf32>
    %24 = math.exp %23 : vector<4x64x64xf32>
    %cst_7 = arith.constant dense<0.000000e+00> : vector<4x64xf32>
    %25 = vector.multi_reduction <add>, %24, %cst_7 [2] : vector<4x64x64xf32> to vector<4x64xf32>
    %26 = vector.shape_cast %25 : vector<4x64xf32> to vector<4x64x1xf32>
    %27 = tpu.reciprocal %26 {approx = true} : vector<4x64x1xf32> -> vector<4x64x1xf32>
    %28 = vector.broadcast %27 : vector<4x64x1xf32> to vector<4x64x64xf32>
    %29 = arith.mulf %24, %28 : vector<4x64x64xf32>
    %30 = arith.truncf %29 : vector<4x64x64xf32> to vector<4x64x64xbf16>
    %31 = arith.truncf %8 : vector<4x64x64xf32> to vector<4x64x64xbf16>
    %cst_8 = arith.constant dense<0.000000e+00> : vector<4x64x64xf32>
    %32 = tpu.matmul %30, %31, %cst_8 {dimension_numbers = #tpu.dot_dimension_numbers<[2], [1], [1], [2], [0, 0, 0, 1, 1, 2], [0], [0]>} : vector<4x64x64xbf16>, vector<4x64x64xbf16>, vector<4x64x64xf32> -> vector<4x64x64xf32>
    %c0_9 = arith.constant 0 : index
    %c0_10 = arith.constant 0 : index
    %c0_11 = arith.constant 0 : index
    %33 = vector.load %arg3[%c0_9, %c0_10, %c0_11] : memref<4x64x64xf32, #tpu.memory_space<vmem>>, vector<4x64x64xf32>
    tpu.vector_store %arg3[%c0_9, %c0_10, %c0_11], %32 {strides = array<i32>} : memref<4x64x64xf32, #tpu.memory_space<vmem>>, vector<4x64x64xf32>,
    return
  }
  func.func @transform_0(%arg0: i32) -> (i32, i32, i32) {
    %c0_i32 = arith.constant 0 : i32
    %c0_i32_0 = arith.constant 0 : i32
    %c0_i32_1 = arith.constant 0 : i32
    return %arg0, %c0_i32, %c0_i32_0 : i32, i32, i32
  }
  func.func @transform_1(%arg0: i32) -> (i32, i32) {
    %c0_i32 = arith.constant 0 : i32
    %c0_i32_0 = arith.constant 0 : i32
    %c0_i32_1 = arith.constant 0 : i32
    return %c0_i32, %c0_i32_0 : i32, i32
  }
  func.func @transform_2(%arg0: i32) -> (i32, i32, i32) {
    %c0_i32 = arith.constant 0 : i32
    %c0_i32_0 = arith.constant 0 : i32
    %c0_i32_1 = arith.constant 0 : i32
    return %arg0, %c0_i32, %c0_i32_0 : i32, i32, i32
  }
}

</mosaic_0001>

<llo_original>
// kernel: tpu_custom_call.1
$region0: #{tpu_custom_call.1}
  #allocation0 [shape = 'u32[]', space=smem, size = 0x4, offset = 0x4, fixed_abs, tag = 'smem constant byte address 0x4 - core index']
  #allocation1 [shape = 'u32[144,128]{1,0:T(1,128)}', space=vmem, size = 0x12000, scoped, tag = 'internal scratch']
  %s0 = inlined_call_operand.hbm [shape: f32[8,64,384], index: 0, kind: input, shape index: {}]
  %s1 = inlined_call_operand.vmem [shape: bf16[384,192], index: 1, kind: input, shape index: {}]
  %s2 = inlined_call_operand.hbm [shape: f32[8,64,64], index: 2, kind: output, shape index: {}]
  %s3 = sld [smem:[#allocation0]]
  $region45: #{tpu_custom_call.1} parent=0
    _
  %s5 = ssub.s32 1, %s3
  %s6 = scalar_select 0, %s5, %s3
  $region1: #{tpu_custom_call.1} parent=0
    #allocation2 [shape = 'u8[786432]{0}', space=vmem, size = 0xc0000, scoped, tag = 'input window, operand 0']
    #allocation3 [shape = 's32[2]{0}', space=sflag, size = 0x8, scoped, tag = 'scoped memory for tpu_custom_call.1']
    #allocation4 [shape = 's32[2]{0}', space=sflag, size = 0x8, scoped, tag = 'scoped memory for tpu_custom_call.1']
    #allocation5 [shape = 'u8[262144]{0}', space=vmem, size = 0x40000, scoped, tag = 'output window, operand 0']
    %7 = vsyncpa [#allocation3], 0
    %s8 = scalar_lea.sflag [#allocation3], 1
    %9 = vsyncpa %s8, 0
    %10 = vsyncpa [#allocation4], 0
    %s11 = scalar_lea.sflag [#allocation4], 1
    %12 = vsyncpa %s11, 0
    loop: start=0, step=1, limit=4
    $region2: #{tpu_custom_call.1} parent=1 // loop_pre_header
      _
    $region3: #{tpu_custom_call.1} parent=1 // loop_header
      %s14 = sphi 0, %s18
      %p15 = scmp.ge.s32.totalorder %s14, 4
      %s24 = sphi 0, %s26
      %s27 = sphi 0, %s24
      %s28 = sphi 0, %s27
      %s44 = sphi 0, %s28
      %s48 = sphi 0, %s48
      %s50 = sphi 0, %s48
      %s51 = sphi 0, %s50
      %s65 = sphi 0, %s51
      %s71 = sphi 0, %s73
      %s74 = sphi 0, %s71
      %s75 = sphi 0, %s74
      %s91 = sphi 0, %s75
    $region4: #{tpu_custom_call.1} parent=1 // loop_header_branch
      %17 = sbr.rel (%p15) target = $region8
    $region5: #{tpu_custom_call.1} parent=1 // loop_body
      %s19 = ssub.s32 %s14, 1
      %s20 = ssub.s32 %s14, 2
      %s21 = sadd.s32 %s14, 1
      %s22 = ssub.s32 %s14, %s21
      %p23 = scmp.eq.s32.totalorder %s22, 0
      %s25 = sadd.s32 %s24, 1
      %s26 = scalar_select %p23, %s24, %s25
      %p29 = pneg %p23
      %p30 = scmp.eq.s32.totalorder %s14, 1
      %p31 = por %p29, %p30
      %p32 = scmp.ne.s32.totalorder %s24, %s27
      %p33 = scmp.eq.s32.totalorder %s14, 0
      %p34 = por %p32, %p33
      %p35 = scmp.ne.s32.totalorder %s24, %s27
      %p36 = scmp.eq.s32.totalorder %s19, 1
      %p37 = por %p35, %p36
      %p38 = scmp.ne.s32.totalorder %s27, %s28
      %p39 = scmp.eq.s32.totalorder %s19, 0
      %p40 = por %p38, %p39
      %p41 = scmp.ne.s32.totalorder %s27, %s28
      %p42 = scmp.eq.s32.totalorder %s20, 1
      %p43 = por %p41, %p42
      %p45 = scmp.ne.s32.totalorder %s28, %s44
      %p46 = scmp.eq.s32.totalorder %s20, 0
      %p47 = por %p45, %p46
      %s49 = sadd.s32 %s48, 1
      %p52 = scmp.eq.s32.totalorder %s14, 1
      %p53 = scmp.ne.s32.totalorder %s48, %s50
      %p54 = scmp.eq.s32.totalorder %s14, 0
      %p55 = por %p53, %p54
      %p56 = scmp.ne.s32.totalorder %s48, %s50
      %p57 = scmp.eq.s32.totalorder %s19, 1
      %p58 = por %p56, %p57
      %p59 = scmp.ne.s32.totalorder %s50, %s51
      %p60 = scmp.eq.s32.totalorder %s19, 0
      %p61 = por %p59, %p60
      %p62 = scmp.ne.s32.totalorder %s50, %s51
      %p63 = scmp.eq.s32.totalorder %s20, 1
      %p64 = por %p62, %p63
      %p66 = scmp.ne.s32.totalorder %s51, %s65
      %p67 = scmp.eq.s32.totalorder %s20, 0
      %p68 = por %p66, %p67
      %s69 = ssub.s32 %s14, %s21
      %p70 = scmp.eq.s32.totalorder %s69, 0
      %s72 = sadd.s32 %s71, 1
      %s73 = scalar_select %p70, %s71, %s72
      %p76 = pneg %p70
      %p77 = scmp.eq.s32.totalorder %s14, 1
      %p78 = por %p76, %p77
      %p79 = scmp.ne.s32.totalorder %s71, %s74
      %p80 = scmp.eq.s32.totalorder %s14, 0
      %p81 = por %p79, %p80
      %p82 = scmp.ne.s32.totalorder %s71, %s74
      %p83 = scmp.eq.s32.totalorder %s19, 1
      %p84 = por %p82, %p83
      %p85 = scmp.ne.s32.totalorder %s74, %s75
      %p86 = scmp.eq.s32.totalorder %s19, 0
      %p87 = por %p85, %p86
      %p88 = scmp.ne.s32.totalorder %s74, %s75
      %p89 = scmp.eq.s32.totalorder %s20, 1
      %p90 = por %p88, %p89
      %p92 = scmp.ne.s32.totalorder %s75, %s91
      %p93 = scmp.eq.s32.totalorder %s20, 0
      %p94 = por %p92, %p93
      %p95 = scmp.le.s32.totalorder 1, %s14
      %p96 = scmp.lt.s32.totalorder %s14, 3
      %p97 = pnand %p95, %p96
      %p98 = pneg %p97
      // Predicated region
      $region9: #{tpu_custom_call.1} parent=5 // pred_check
        _
      $region10: #{tpu_custom_call.1} parent=5 // pred_check_branch
        %100 = sbr.rel (%p97) target = $region12
      $region11: #{tpu_custom_call.1} parent=5 // pred_region
        %s101 = ssub.s32 %s14, 1
        // Predicated region
        $region13: #{tpu_custom_call.1} parent=11 // pred_check
          %p102 = pneg %p61
        $region14: #{tpu_custom_call.1} parent=11 // pred_check_branch
          %104 = sbr.rel (%p102) target = $region16
        $region15: #{tpu_custom_call.1} parent=11 // pred_region
          _
        $region16: #{tpu_custom_call.1} parent=11 // pred_fallthru
          _
      $region12: #{tpu_custom_call.1} parent=5 // pred_fallthru
        _
      %p105 = scmp.lt.s32.totalorder %s14, 2
      // Predicated region
      $region17: #{tpu_custom_call.1} parent=5 // pred_check
        %p106 = pneg %p105
      $region18: #{tpu_custom_call.1} parent=5 // pred_check_branch
        %108 = sbr.rel (%p106) target = $region20
      $region19: #{tpu_custom_call.1} parent=5 // pred_region
        // Predicated region
        $region21: #{tpu_custom_call.1} parent=19 // pred_check
          %p109 = pneg %p34
        $region22: #{tpu_custom_call.1} parent=19 // pred_check_branch
          %111 = sbr.rel (%p109) target = $region24
        $region23: #{tpu_custom_call.1} parent=19 // pred_region
          %s112 = sand.u32 %s24, 1
          %s113 = scalar_lea.sflag [#allocation3], %s112
          %s114 = sand.u32 %s24, 1
          %s115 = smul.addr %s114, 768
          %s116 = scalar_lea.vmem [#allocation2], %s115
          %s117 = smul.u32 4, %s14
          %s119 = ssub.s32 12288, 12288
          %120 = vsyncadd %s113, %s119
          %s121 = smul.addr %s117, 24
          %s122 = smul.addr %s121, 128
          %s123 = scalar_lea.hbm %s0, %s122
          %s124 = sshll.u32 %s116, 4
          %s125 = int_to_ptr.vmem [resolvable:$true] %s124
          %130 = dma.hbm_to_vmem [thread:$0]  %s123, 12288, %s125, %s113, 384, 384, 24
        $region24: #{tpu_custom_call.1} parent=19 // pred_fallthru
          _
      $region20: #{tpu_custom_call.1} parent=5 // pred_fallthru
        _
      %p131 = scmp.le.s32.totalorder 1, %s14
      %p132 = scmp.lt.s32.totalorder %s14, 3
      %p133 = pnand %p131, %p132
      %p134 = pneg %p133
      // Predicated region
      $region25: #{tpu_custom_call.1} parent=5 // pred_check
        _
      $region26: #{tpu_custom_call.1} parent=5 // pred_check_branch
        %136 = sbr.rel (%p133) target = $region28
      $region27: #{tpu_custom_call.1} parent=5 // pred_region
        %s137 = ssub.s32 %s14, 1
        %s138 = sand.u32 %s27, 1
        %s139 = scalar_lea.sflag [#allocation3], %s138
        %s140 = sand.u32 %s27, 1
        %s141 = smul.addr %s140, 768
        %s142 = scalar_lea.vmem [#allocation2], %s141
        // Predicated region
        $region29: #{tpu_custom_call.1} parent=27 // pred_check
          %p143 = pneg %p40
        $region30: #{tpu_custom_call.1} parent=27 // pred_check_branch
          %145 = sbr.rel (%p143) target = $region32
        $region31: #{tpu_custom_call.1} parent=27 // pred_region
          %146 = dma.done %s139, 12288
        $region32: #{tpu_custom_call.1} parent=27 // pred_fallthru
          _
        %s147 = sand.u32 %s27, 1
        %s148 = scalar_lea.sflag [#allocation3], %s147
        %s149 = sand.u32 %s27, 1
        %s150 = smul.addr %s149, 768
        %s151 = scalar_lea.vmem [#allocation2], %s150
        %p152 = pneg %p40
        %p153 = pneg %p37
        %p154 = pneg %p61
        %p155 = pneg %p58
        %p156 = pneg %p87
        %p157 = pneg %p84
        %s158 = sand.u32 %s74, 1
        %s159 = scalar_lea.sflag [#allocation4], %s158
        %s160 = sand.u32 %s74, 1
        %s161 = smul.addr %s160, 256
        %s162 = scalar_lea.vmem [#allocation5], %s161
        %s163 = smul.u32 4, %s19
        %s164 = smul.u32 4, %s19
        %v166 = vld [vmem:[%s142] sm:$0xff]
        %v167 = vld [vmem:[%s142 + $0x8] sm:$0xff]
        %v168 = vld [vmem:[%s142 + $0x10] sm:$0xff]
        %v169 = vld [vmem:[%s142 + $0x18] sm:$0xff]
        %v170 = vld [vmem:[%s142 + $0x20] sm:$0xff]
        %v171 = vld [vmem:[%s142 + $0x28] sm:$0xff]
        %v172 = vld [vmem:[%s142 + $0x30] sm:$0xff]
        %v173 = vld [vmem:[%s142 + $0x38] sm:$0xff]
        %v174 = vld [vmem:[%s142 + $0x40] sm:$0xff]
        %v175 = vld [vmem:[%s142 + $0x48] sm:$0xff]
        %v176 = vld [vmem:[%s142 + $0x50] sm:$0xff]
        %v177 = vld [vmem:[%s142 + $0x58] sm:$0xff]
        %v178 = vld [vmem:[%s142 + $0x60] sm:$0xff]
        %v179 = vld [vmem:[%s142 + $0x68] sm:$0xff]
        %v180 = vld [vmem:[%s142 + $0x70] sm:$0xff]
        %v181 = vld [vmem:[%s142 + $0x78] sm:$0xff]
        %v182 = vld [vmem:[%s142 + $0x80] sm:$0xff]
        %v183 = vld [vmem:[%s142 + $0x88] sm:$0xff]
        %v184 = vld [vmem:[%s142 + $0x90] sm:$0xff]
        %v185 = vld [vmem:[%s142 + $0x98] sm:$0xff]
        %v186 = vld [vmem:[%s142 + $0xa0] sm:$0xff]
        %v187 = vld [vmem:[%s142 + $0xa8] sm:$0xff]
        %v188 = vld [vmem:[%s142 + $0xb0] sm:$0xff]
        %v189 = vld [vmem:[%s142 + $0xb8] sm:$0xff]
        %v190 = vld [vmem:[%s142 + $0xc0] sm:$0xff]
        %v191 = vld [vmem:[%s142 + $0xc8] sm:$0xff]
        %v192 = vld [vmem:[%s142 + $0xd0] sm:$0xff]
        %v193 = vld [vmem:[%s142 + $0xd8] sm:$0xff]
        %v194 = vld [vmem:[%s142 + $0xe0] sm:$0xff]
        %v195 = vld [vmem:[%s142 + $0xe8] sm:$0xff]
        %v196 = vld [vmem:[%s142 + $0xf0] sm:$0xff]
        %v197 = vld [vmem:[%s142 + $0xf8] sm:$0xff]
        %v198 = vld [vmem:[%s142 + $0x100] sm:$0xff]
        %v199 = vld [vmem:[%s142 + $0x108] sm:$0xff]
        %v200 = vld [vmem:[%s142 + $0x110] sm:$0xff]
        %v201 = vld [vmem:[%s142 + $0x118] sm:$0xff]
        %v202 = vld [vmem:[%s142 + $0x120] sm:$0xff]
        %v203 = vld [vmem:[%s142 + $0x128] sm:$0xff]
        %v204 = vld [vmem:[%s142 + $0x130] sm:$0xff]
        %v205 = vld [vmem:[%s142 + $0x138] sm:$0xff]
        %v206 = vld [vmem:[%s142 + $0x140] sm:$0xff]
        %v207 = vld [vmem:[%s142 + $0x148] sm:$0xff]
        %v208 = vld [vmem:[%s142 + $0x150] sm:$0xff]
        %v209 = vld [vmem:[%s142 + $0x158] sm:$0xff]
        %v210 = vld [vmem:[%s142 + $0x160] sm:$0xff]
        %v211 = vld [vmem:[%s142 + $0x168] sm:$0xff]
        %v212 = vld [vmem:[%s142 + $0x170] sm:$0xff]
        %v213 = vld [vmem:[%s142 + $0x178] sm:$0xff]
        %v214 = vld [vmem:[%s142 + $0x180] sm:$0xff]
        %v215 = vld [vmem:[%s142 + $0x188] sm:$0xff]
        %v216 = vld [vmem:[%s142 + $0x190] sm:$0xff]
        %v217 = vld [vmem:[%s142 + $0x198] sm:$0xff]
        %v218 = vld [vmem:[%s142 + $0x1a0] sm:$0xff]
        %v219 = vld [vmem:[%s142 + $0x1a8] sm:$0xff]
        %v220 = vld [vmem:[%s142 + $0x1b0] sm:$0xff]
        %v221 = vld [vmem:[%s142 + $0x1b8] sm:$0xff]
        %v222 = vld [vmem:[%s142 + $0x1c0] sm:$0xff]
        %v223 = vld [vmem:[%s142 + $0x1c8] sm:$0xff]
        %v224 = vld [vmem:[%s142 + $0x1d0] sm:$0xff]
        %v225 = vld [vmem:[%s142 + $0x1d8] sm:$0xff]
        %v226 = vld [vmem:[%s142 + $0x1e0] sm:$0xff]
        %v227 = vld [vmem:[%s142 + $0x1e8] sm:$0xff]
        %v228 = vld [vmem:[%s142 + $0x1f0] sm:$0xff]
        %v229 = vld [vmem:[%s142 + $0x1f8] sm:$0xff]
        %v230 = vld [vmem:[%s142 + $0x200] sm:$0xff]
        %v231 = vld [vmem:[%s142 + $0x208] sm:$0xff]
        %v232 = vld [vmem:[%s142 + $0x210] sm:$0xff]
        %v233 = vld [vmem:[%s142 + $0x218] sm:$0xff]
        %v234 = vld [vmem:[%s142 + $0x220] sm:$0xff]
        %v235 = vld [vmem:[%s142 + $0x228] sm:$0xff]
        %v236 = vld [vmem:[%s142 + $0x230] sm:$0xff]
        %v237 = vld [vmem:[%s142 + $0x238] sm:$0xff]
        %v238 = vld [vmem:[%s142 + $0x240] sm:$0xff]
        %v239 = vld [vmem:[%s142 + $0x248] sm:$0xff]
        %v240 = vld [vmem:[%s142 + $0x250] sm:$0xff]
        %v241 = vld [vmem:[%s142 + $0x258] sm:$0xff]
        %v242 = vld [vmem:[%s142 + $0x260] sm:$0xff]
        %v243 = vld [vmem:[%s142 + $0x268] sm:$0xff]
        %v244 = vld [vmem:[%s142 + $0x270] sm:$0xff]
        %v245 = vld [vmem:[%s142 + $0x278] sm:$0xff]
        %v246 = vld [vmem:[%s142 + $0x280] sm:$0xff]
        %v247 = vld [vmem:[%s142 + $0x288] sm:$0xff]
        %v248 = vld [vmem:[%s142 + $0x290] sm:$0xff]
        %v249 = vld [vmem:[%s142 + $0x298] sm:$0xff]
        %v250 = vld [vmem:[%s142 + $0x2a0] sm:$0xff]
        %v251 = vld [vmem:[%s142 + $0x2a8] sm:$0xff]
        %v252 = vld [vmem:[%s142 + $0x2b0] sm:$0xff]
        %v253 = vld [vmem:[%s142 + $0x2b8] sm:$0xff]
        %v254 = vld [vmem:[%s142 + $0x2c0] sm:$0xff]
        %v255 = vld [vmem:[%s142 + $0x2c8] sm:$0xff]
        %v256 = vld [vmem:[%s142 + $0x2d0] sm:$0xff]
        %v257 = vld [vmem:[%s142 + $0x2d8] sm:$0xff]
        %v258 = vld [vmem:[%s142 + $0x2e0] sm:$0xff]
        %v259 = vld [vmem:[%s142 + $0x2e8] sm:$0xff]
        %v260 = vld [vmem:[%s142 + $0x2f0] sm:$0xff]
        %v261 = vld [vmem:[%s142 + $0x2f8] sm:$0xff]
        %v262 = vpack.c.bf16 %v169, %v166
        %v263 = vpack.c.bf16 %v170, %v167
        %v264 = vpack.c.bf16 %v171, %v168
        %v265 = vpack.c.bf16 %v175, %v172
        %v266 = vpack.c.bf16 %v176, %v173
        %v267 = vpack.c.bf16 %v177, %v174
        %v268 = vpack.c.bf16 %v181, %v178
        %v269 = vpack.c.bf16 %v182, %v179
        %v270 = vpack.c.bf16 %v183, %v180
        %v271 = vpack.c.bf16 %v187, %v184
        %v272 = vpack.c.bf16 %v188, %v185
        %v273 = vpack.c.bf16 %v189, %v186
        %v274 = vpack.c.bf16 %v193, %v190
        %v275 = vpack.c.bf16 %v194, %v191
        %v276 = vpack.c.bf16 %v195, %v192
        %v277 = vpack.c.bf16 %v199, %v196
        %v278 = vpack.c.bf16 %v200, %v197
        %v279 = vpack.c.bf16 %v201, %v198
        %v280 = vpack.c.bf16 %v205, %v202
        %v281 = vpack.c.bf16 %v206, %v203
        %v282 = vpack.c.bf16 %v207, %v204
        %v283 = vpack.c.bf16 %v211, %v208
        %v284 = vpack.c.bf16 %v212, %v209
        %v285 = vpack.c.bf16 %v213, %v210
        %v286 = vpack.c.bf16 %v217, %v214
        %v287 = vpack.c.bf16 %v218, %v215
        %v288 = vpack.c.bf16 %v219, %v216
        %v289 = vpack.c.bf16 %v223, %v220
        %v290 = vpack.c.bf16 %v224, %v221
        %v291 = vpack.c.bf16 %v225, %v222
        %v292 = vpack.c.bf16 %v229, %v226
        %v293 = vpack.c.bf16 %v230, %v227
        %v294 = vpack.c.bf16 %v231, %v228
        %v295 = vpack.c.bf16 %v235, %v232
        %v296 = vpack.c.bf16 %v236, %v233
        %v297 = vpack.c.bf16 %v237, %v234
        %v298 = vpack.c.bf16 %v241, %v238
        %v299 = vpack.c.bf16 %v242, %v239
        %v300 = vpack.c.bf16 %v243, %v240
        %v301 = vpack.c.bf16 %v247, %v244
        %v302 = vpack.c.bf16 %v248, %v245
        %v303 = vpack.c.bf16 %v249, %v246
        %v304 = vpack.c.bf16 %v253, %v250
        %v305 = vpack.c.bf16 %v254, %v251
        %v306 = vpack.c.bf16 %v255, %v252
        %v307 = vpack.c.bf16 %v259, %v256
        %v308 = vpack.c.bf16 %v260, %v257
        %v309 = vpack.c.bf16 %v261, %v258
        %v310 = vld [vmem:[%s1] sm:$0xff]
        %v311 = vld [vmem:[%s1 + $0x8] sm:$0xff]
        %v312 = vld [vmem:[%s1 + $0x10] sm:$0xff]
        %v313 = vld [vmem:[%s1 + $0x18] sm:$0xff]
        %v314 = vld [vmem:[%s1 + $0x20] sm:$0xff]
        %v315 = vld [vmem:[%s1 + $0x28] sm:$0xff]
        %v316 = vld [vmem:[%s1 + $0x30] sm:$0xff]
        %v317 = vld [vmem:[%s1 + $0x38] sm:$0xff]
        %v318 = vld [vmem:[%s1 + $0x40] sm:$0xff]
        %v319 = vld [vmem:[%s1 + $0x48] sm:$0xff]
        %v320 = vld [vmem:[%s1 + $0x50] sm:$0xff]
        %v321 = vld [vmem:[%s1 + $0x58] sm:$0xff]
        %v322 = vld [vmem:[%s1 + $0x60] sm:$0xff]
        %v323 = vld [vmem:[%s1 + $0x68] sm:$0xff]
        %v324 = vld [vmem:[%s1 + $0x70] sm:$0xff]
        %v325 = vld [vmem:[%s1 + $0x78] sm:$0xff]
        %v326 = vld [vmem:[%s1 + $0x80] sm:$0xff]
        %v327 = vld [vmem:[%s1 + $0x88] sm:$0xff]
        %v328 = vld [vmem:[%s1 + $0x90] sm:$0xff]
        %v329 = vld [vmem:[%s1 + $0x98] sm:$0xff]
        %v330 = vld [vmem:[%s1 + $0xa0] sm:$0xff]
        %v331 = vld [vmem:[%s1 + $0xa8] sm:$0xff]
        %v332 = vld [vmem:[%s1 + $0xb0] sm:$0xff]
        %v333 = vld [vmem:[%s1 + $0xb8] sm:$0xff]
        %v334 = vld [vmem:[%s1 + $0xc0] sm:$0xff]
        %v335 = vld [vmem:[%s1 + $0xc8] sm:$0xff]
        %v336 = vld [vmem:[%s1 + $0xd0] sm:$0xff]
        %v337 = vld [vmem:[%s1 + $0xd8] sm:$0xff]
        %v338 = vld [vmem:[%s1 + $0xe0] sm:$0xff]
        %v339 = vld [vmem:[%s1 + $0xe8] sm:$0xff]
        %v340 = vld [vmem:[%s1 + $0xf0] sm:$0xff]
        %v341 = vld [vmem:[%s1 + $0xf8] sm:$0xff]
        %v342 = vld [vmem:[%s1 + $0x100] sm:$0xff]
        %v343 = vld [vmem:[%s1 + $0x108] sm:$0xff]
        %v344 = vld [vmem:[%s1 + $0x110] sm:$0xff]
        %v345 = vld [vmem:[%s1 + $0x118] sm:$0xff]
        %v346 = vld [vmem:[%s1 + $0x120] sm:$0xff]
        %v347 = vld [vmem:[%s1 + $0x128] sm:$0xff]
        %v348 = vld [vmem:[%s1 + $0x130] sm:$0xff]
        %v349 = vld [vmem:[%s1 + $0x138] sm:$0xff]
        %v350 = vld [vmem:[%s1 + $0x140] sm:$0xff]
        %v351 = vld [vmem:[%s1 + $0x148] sm:$0xff]
        %v352 = vld [vmem:[%s1 + $0x150] sm:$0xff]
        %v353 = vld [vmem:[%s1 + $0x158] sm:$0xff]
        %v354 = vld [vmem:[%s1 + $0x160] sm:$0xff]
        %v355 = vld [vmem:[%s1 + $0x168] sm:$0xff]
        %v356 = vld [vmem:[%s1 + $0x170] sm:$0xff]
        %v357 = vld [vmem:[%s1 + $0x178] sm:$0xff]
        %v406 = vunpack.c.l.b16 %v310
        %v407 = vunpack.c.h.b16 %v310
        %v408 = vunpack.c.l.b16 %v311
        %v409 = vunpack.c.h.b16 %v311
        %v410 = vunpack.c.l.b16 %v312
        %v411 = vunpack.c.h.b16 %v312
        %v412 = vunpack.c.l.b16 %v313
        %v413 = vunpack.c.h.b16 %v313
        %v414 = vunpack.c.l.b16 %v314
        %v415 = vunpack.c.h.b16 %v314
        %v416 = vunpack.c.l.b16 %v315
        %v417 = vunpack.c.h.b16 %v315
        %v418 = vunpack.c.l.b16 %v316
        %v419 = vunpack.c.h.b16 %v316
        %v420 = vunpack.c.l.b16 %v317
        %v421 = vunpack.c.h.b16 %v317
        %v422 = vunpack.c.l.b16 %v318
        %v423 = vunpack.c.h.b16 %v318
        %v424 = vunpack.c.l.b16 %v319
        %v425 = vunpack.c.h.b16 %v319
        %v426 = vunpack.c.l.b16 %v320
        %v427 = vunpack.c.h.b16 %v320
        %v428 = vunpack.c.l.b16 %v321
        %v429 = vunpack.c.h.b16 %v321
        %v430 = vunpack.c.l.b16 %v322
        %v431 = vunpack.c.h.b16 %v322
        %v432 = vunpack.c.l.b16 %v323
        %v433 = vunpack.c.h.b16 %v323
        %v434 = vunpack.c.l.b16 %v324
        %v435 = vunpack.c.h.b16 %v324
        %v436 = vunpack.c.l.b16 %v325
        %v437 = vunpack.c.h.b16 %v325
        %v438 = vunpack.c.l.b16 %v326
        %v439 = vunpack.c.h.b16 %v326
        %v440 = vunpack.c.l.b16 %v327
        %v441 = vunpack.c.h.b16 %v327
        %v442 = vunpack.c.l.b16 %v328
        %v443 = vunpack.c.h.b16 %v328
        %v444 = vunpack.c.l.b16 %v329
        %v445 = vunpack.c.h.b16 %v329
        %v446 = vunpack.c.l.b16 %v330
        %v447 = vunpack.c.h.b16 %v330
        %v448 = vunpack.c.l.b16 %v331
        %v449 = vunpack.c.h.b16 %v331
        %v450 = vunpack.c.l.b16 %v332
        %v451 = vunpack.c.h.b16 %v332
        %v452 = vunpack.c.l.b16 %v333
        %v453 = vunpack.c.h.b16 %v333
        %v454 = vunpack.c.l.b16 %v334
        %v455 = vunpack.c.h.b16 %v334
        %v456 = vunpack.c.l.b16 %v335
        %v457 = vunpack.c.h.b16 %v335
        %v458 = vunpack.c.l.b16 %v336
        %v459 = vunpack.c.h.b16 %v336
        %v460 = vunpack.c.l.b16 %v337
        %v461 = vunpack.c.h.b16 %v337
        %v462 = vunpack.c.l.b16 %v338
        %v463 = vunpack.c.h.b16 %v338
        %v464 = vunpack.c.l.b16 %v339
        %v465 = vunpack.c.h.b16 %v339
        %v466 = vunpack.c.l.b16 %v340
        %v467 = vunpack.c.h.b16 %v340
        %v468 = vunpack.c.l.b16 %v341
        %v469 = vunpack.c.h.b16 %v341
        %v470 = vunpack.c.l.b16 %v342
        %v471 = vunpack.c.h.b16 %v342
        %v472 = vunpack.c.l.b16 %v343
        %v473 = vunpack.c.h.b16 %v343
        %v474 = vunpack.c.l.b16 %v344
        %v475 = vunpack.c.h.b16 %v344
        %v476 = vunpack.c.l.b16 %v345
        %v477 = vunpack.c.h.b16 %v345
        %v478 = vunpack.c.l.b16 %v346
        %v479 = vunpack.c.h.b16 %v346
        %v480 = vunpack.c.l.b16 %v347
        %v481 = vunpack.c.h.b16 %v347
        %v482 = vunpack.c.l.b16 %v348
        %v483 = vunpack.c.h.b16 %v348
        %v484 = vunpack.c.l.b16 %v349
        %v485 = vunpack.c.h.b16 %v349
        %v486 = vunpack.c.l.b16 %v350
        %v487 = vunpack.c.h.b16 %v350
        %v488 = vunpack.c.l.b16 %v351
        %v489 = vunpack.c.h.b16 %v351
        %v490 = vunpack.c.l.b16 %v352
        %v491 = vunpack.c.h.b16 %v352
        %v492 = vunpack.c.l.b16 %v353
        %v493 = vunpack.c.h.b16 %v353
        %v494 = vunpack.c.l.b16 %v354
        %v495 = vunpack.c.h.b16 %v354
        %v496 = vunpack.c.l.b16 %v355
        %v497 = vunpack.c.h.b16 %v355
        %v498 = vunpack.c.l.b16 %v356
        %v499 = vunpack.c.h.b16 %v356
        %v500 = vunpack.c.l.b16 %v357
        %v501 = vunpack.c.h.b16 %v357
        %v502 = vpack.c.b16 %v408, %v406
        %v503 = vpack.c.b16 %v409, %v407
        %v504 = vpack.c.b16 %v412, %v410
        %v505 = vpack.c.b16 %v413, %v411
        %v506 = vpack.c.b16 %v416, %v414
        %v507 = vpack.c.b16 %v417, %v415
        %v508 = vpack.c.b16 %v420, %v418
        %v509 = vpack.c.b16 %v421, %v419
        %v510 = vpack.c.b16 %v424, %v422
        %v511 = vpack.c.b16 %v425, %v423
        %v512 = vpack.c.b16 %v428, %v426
        %v513 = vpack.c.b16 %v429, %v427
        %v514 = vpack.c.b16 %v432, %v430
        %v515 = vpack.c.b16 %v433, %v431
        %v516 = vpack.c.b16 %v436, %v434
        %v517 = vpack.c.b16 %v437, %v435
        %v518 = vpack.c.b16 %v440, %v438
        %v519 = vpack.c.b16 %v441, %v439
        %v520 = vpack.c.b16 %v444, %v442
        %v521 = vpack.c.b16 %v445, %v443
        %v522 = vpack.c.b16 %v448, %v446
        %v523 = vpack.c.b16 %v449, %v447
        %v524 = vpack.c.b16 %v452, %v450
        %v525 = vpack.c.b16 %v453, %v451
        %v526 = vpack.c.b16 %v456, %v454
        %v527 = vpack.c.b16 %v457, %v455
        %v528 = vpack.c.b16 %v460, %v458
        %v529 = vpack.c.b16 %v461, %v459
        %v530 = vpack.c.b16 %v464, %v462
        %v531 = vpack.c.b16 %v465, %v463
        %v532 = vpack.c.b16 %v468, %v466
        %v533 = vpack.c.b16 %v469, %v467
        %v534 = vpack.c.b16 %v472, %v470
        %v535 = vpack.c.b16 %v473, %v471
        %v536 = vpack.c.b16 %v476, %v474
        %v537 = vpack.c.b16 %v477, %v475
        %v538 = vpack.c.b16 %v480, %v478
        %v539 = vpack.c.b16 %v481, %v479
        %v540 = vpack.c.b16 %v484, %v482
        %v541 = vpack.c.b16 %v485, %v483
        %v542 = vpack.c.b16 %v488, %v486
        %v543 = vpack.c.b16 %v489, %v487
        %v544 = vpack.c.b16 %v492, %v490
        %v545 = vpack.c.b16 %v493, %v491
        %v546 = vpack.c.b16 %v496, %v494
        %v547 = vpack.c.b16 %v497, %v495
        %v548 = vpack.c.b16 %v500, %v498
        %v549 = vpack.c.b16 %v501, %v499
        %598 = vmatprep.subr.bf16.mxu0 %v517
        %599 = vmatpush1.bf16.msra.mxu0 %v516
        %600 = vmatprep.subr.bf16.mxu0 %v515
        %601 = vmatpush1.bf16.msra.mxu0 %v514
        %602 = vmatprep.subr.bf16.mxu0 %v513
        %603 = vmatpush1.bf16.msra.mxu0 %v512
        %604 = vmatprep.subr.bf16.mxu0 %v511
        %605 = vmatpush1.bf16.msra.mxu0 %v510
        %606 = vmatprep.subr.bf16.mxu0 %v509
        %607 = vmatpush1.bf16.msra.mxu0 %v508
        %608 = vmatprep.subr.bf16.mxu0 %v507
        %609 = vmatpush1.bf16.msra.mxu0 %v506
        %610 = vmatprep.subr.bf16.mxu0 %v505
        %611 = vmatpush1.bf16.msra.mxu0 %v504
        %612 = vmatprep.subr.bf16.mxu0 %v503
        %613 = vmatpush1.bf16.msra.mxu0 %v502
        %614 = vmatprep.subr.bf16.mxu0 %v533
        %615 = vmatpush2.bf16.msra.mxu0 %v532
        %616 = vmatprep.subr.bf16.mxu0 %v531
        %617 = vmatpush2.bf16.msra.mxu0 %v530
        %618 = vmatprep.subr.bf16.mxu0 %v529
        %619 = vmatpush2.bf16.msra.mxu0 %v528
        %620 = vmatprep.subr.bf16.mxu0 %v527
        %621 = vmatpush2.bf16.msra.mxu0 %v526
        %622 = vmatprep.subr.bf16.mxu0 %v525
        %623 = vmatpush2.bf16.msra.mxu0 %v524
        %624 = vmatprep.subr.bf16.mxu0 %v523
        %625 = vmatpush2.bf16.msra.mxu0 %v522
        %626 = vmatprep.subr.bf16.mxu0 %v521
        %627 = vmatpush2.bf16.msra.mxu0 %v520
        %628 = vmatprep.subr.bf16.mxu0 %v519
        %629 = vmatpush2.bf16.msra.mxu0 %v518
        %630 = vmatprep.mubr.bf16.mxu0 %v263
        %631 = vmatmul.mubr.bf16.gmra.mxu0 %v262
        %v632 = vpop.f32.mrf.mxu0
        %v633 = vadd.f32 0.0, %v632
        %v634 = vpop.f32.mrf.mxu0
        %v635 = vadd.f32 0.0, %v634
        %v636 = vpop.f32.mrf.mxu0
        %v637 = vadd.f32 0.0, %v636
        %v638 = vpop.f32.mrf.mxu0
        %v639 = vadd.f32 0.0, %v638
        %640 = vmatprep.mubr.bf16.mxu0 %v266
        %641 = vmatmul.mubr.bf16.gmra.mxu0 %v265
        %v642 = vpop.f32.mrf.mxu0
        %v643 = vadd.f32 0.0, %v642
        %v644 = vpop.f32.mrf.mxu0
        %v645 = vadd.f32 0.0, %v644
        %v646 = vpop.f32.mrf.mxu0
        %v647 = vadd.f32 0.0, %v646
        %v648 = vpop.f32.mrf.mxu0
        %v649 = vadd.f32 0.0, %v648
        %650 = vmatprep.mubr.bf16.mxu0 %v269
        %651 = vmatmul.mubr.bf16.gmra.mxu0 %v268
        %v652 = vpop.f32.mrf.mxu0
        %v653 = vadd.f32 0.0, %v652
        %v654 = vpop.f32.mrf.mxu0
        %v655 = vadd.f32 0.0, %v654
        %v656 = vpop.f32.mrf.mxu0
        %v657 = vadd.f32 0.0, %v656
        %v658 = vpop.f32.mrf.mxu0
        %v659 = vadd.f32 0.0, %v658
        %660 = vmatprep.mubr.bf16.mxu0 %v272
        %661 = vmatmul.mubr.bf16.gmra.mxu0 %v271
        %v662 = vpop.f32.mrf.mxu0
        %v663 = vadd.f32 0.0, %v662
        %v664 = vpop.f32.mrf.mxu0
        %v665 = vadd.f32 0.0, %v664
        %v666 = vpop.f32.mrf.mxu0
        %v667 = vadd.f32 0.0, %v666
        %v668 = vpop.f32.mrf.mxu0
        %v669 = vadd.f32 0.0, %v668
        %670 = vmatprep.mubr.bf16.mxu0 %v275
        %671 = vmatmul.mubr.bf16.gmra.mxu0 %v274
        %v672 = vpop.f32.mrf.mxu0
        %v673 = vadd.f32 0.0, %v672
        %v674 = vpop.f32.mrf.mxu0
        %v675 = vadd.f32 0.0, %v674
        %v676 = vpop.f32.mrf.mxu0
        %v677 = vadd.f32 0.0, %v676
        %v678 = vpop.f32.mrf.mxu0
        %v679 = vadd.f32 0.0, %v678
        %680 = vmatprep.mubr.bf16.mxu0 %v278
        %681 = vmatmul.mubr.bf16.gmra.mxu0 %v277
        %v682 = vpop.f32.mrf.mxu0
        %v683 = vadd.f32 0.0, %v682
        %v684 = vpop.f32.mrf.mxu0
        %v685 = vadd.f32 0.0, %v684
        %v686 = vpop.f32.mrf.mxu0
        %v687 = vadd.f32 0.0, %v686
        %v688 = vpop.f32.mrf.mxu0
        %v689 = vadd.f32 0.0, %v688
        %690 = vmatprep.mubr.bf16.mxu0 %v281
        %691 = vmatmul.mubr.bf16.gmra.mxu0 %v280
        %v692 = vpop.f32.mrf.mxu0
        %v693 = vadd.f32 0.0, %v692
        %v694 = vpop.f32.mrf.mxu0
        %v695 = vadd.f32 0.0, %v694
        %v696 = vpop.f32.mrf.mxu0
        %v697 = vadd.f32 0.0, %v696
        %v698 = vpop.f32.mrf.mxu0
        %v699 = vadd.f32 0.0, %v698
        %700 = vmatprep.mubr.bf16.mxu0 %v284
        %701 = vmatmul.mubr.bf16.gmra.mxu0 %v283
        %v702 = vpop.f32.mrf.mxu0
        %v703 = vadd.f32 0.0, %v702
        %v704 = vpop.f32.mrf.mxu0
        %v705 = vadd.f32 0.0, %v704
        %v706 = vpop.f32.mrf.mxu0
        %v707 = vadd.f32 0.0, %v706
        %v708 = vpop.f32.mrf.mxu0
        %v709 = vadd.f32 0.0, %v708
        %710 = vmatprep.mubr.bf16.mxu0 %v287
        %711 = vmatmul.mubr.bf16.gmra.mxu0 %v286
        %v712 = vpop.f32.mrf.mxu0
        %v713 = vadd.f32 0.0, %v712
        %v714 = vpop.f32.mrf.mxu0
        %v715 = vadd.f32 0.0, %v714
        %v716 = vpop.f32.mrf.mxu0
        %v717 = vadd.f32 0.0, %v716
        %v718 = vpop.f32.mrf.mxu0
        %v719 = vadd.f32 0.0, %v718
        %720 = vmatprep.mubr.bf16.mxu0 %v290
        %721 = vmatmul.mubr.bf16.gmra.mxu0 %v289
        %v722 = vpop.f32.mrf.mxu0
        %v723 = vadd.f32 0.0, %v722
        %v724 = vpop.f32.mrf.mxu0
        %v725 = vadd.f32 0.0, %v724
        %v726 = vpop.f32.mrf.mxu0
        %v727 = vadd.f32 0.0, %v726
        %v728 = vpop.f32.mrf.mxu0
        %v729 = vadd.f32 0.0, %v728
        %730 = vmatprep.mubr.bf16.mxu0 %v293
        %731 = vmatmul.mubr.bf16.gmra.mxu0 %v292
        %v732 = vpop.f32.mrf.mxu0
        %v733 = vadd.f32 0.0, %v732
        %v734 = vpop.f32.mrf.mxu0
        %v735 = vadd.f32 0.0, %v734
        %v736 = vpop.f32.mrf.mxu0
        %v737 = vadd.f32 0.0, %v736
        %v738 = vpop.f32.mrf.mxu0
        %v739 = vadd.f32 0.0, %v738
        %740 = vmatprep.mubr.bf16.mxu0 %v296
        %741 = vmatmul.mubr.bf16.gmra.mxu0 %v295
        %v742 = vpop.f32.mrf.mxu0
        %v743 = vadd.f32 0.0, %v742
        %v744 = vpop.f32.mrf.mxu0
        %v745 = vadd.f32 0.0, %v744
        %v746 = vpop.f32.mrf.mxu0
        %v747 = vadd.f32 0.0, %v746
        %v748 = vpop.f32.mrf.mxu0
        %v749 = vadd.f32 0.0, %v748
        %750 = vmatprep.mubr.bf16.mxu0 %v299
        %751 = vmatmul.mubr.bf16.gmra.mxu0 %v298
        %v752 = vpop.f32.mrf.mxu0
        %v753 = vadd.f32 0.0, %v752
        %v754 = vpop.f32.mrf.mxu0
        %v755 = vadd.f32 0.0, %v754
        %v756 = vpop.f32.mrf.mxu0
        %v757 = vadd.f32 0.0, %v756
        %v758 = vpop.f32.mrf.mxu0
        %v759 = vadd.f32 0.0, %v758
        %760 = vmatprep.mubr.bf16.mxu0 %v302
        %761 = vmatmul.mubr.bf16.gmra.mxu0 %v301
        %v762 = vpop.f32.mrf.mxu0
        %v763 = vadd.f32 0.0, %v762
        %v764 = vpop.f32.mrf.mxu0
        %v765 = vadd.f32 0.0, %v764
        %v766 = vpop.f32.mrf.mxu0
        %v767 = vadd.f32 0.0, %v766
        %v768 = vpop.f32.mrf.mxu0
        %v769 = vadd.f32 0.0, %v768
        %770 = vmatprep.mubr.bf16.mxu0 %v305
        %771 = vmatmul.mubr.bf16.gmra.mxu0 %v304
        %v772 = vpop.f32.mrf.mxu0
        %v773 = vadd.f32 0.0, %v772
        %v774 = vpop.f32.mrf.mxu0
        %v775 = vadd.f32 0.0, %v774
        %v776 = vpop.f32.mrf.mxu0
        %v777 = vadd.f32 0.0, %v776
        %v778 = vpop.f32.mrf.mxu0
        %v779 = vadd.f32 0.0, %v778
        %780 = vmatprep.mubr.bf16.mxu0 %v308
        %781 = vmatmul.mubr.bf16.gmra.mxu0 %v307
        %v782 = vpop.f32.mrf.mxu0
        %v783 = vadd.f32 0.0, %v782
        %v784 = vpop.f32.mrf.mxu0
        %v785 = vadd.f32 0.0, %v784
        %v786 = vpop.f32.mrf.mxu0
        %v787 = vadd.f32 0.0, %v786
        %v788 = vpop.f32.mrf.mxu0
        %v789 = vadd.f32 0.0, %v788
        %790 = vdwg.mxu0
        %791 = vmatprep.subr.bf16.mxu0 %v549
        %792 = vmatpush1.bf16.msra.mxu0 %v548
        %793 = vmatprep.subr.bf16.mxu0 %v547
        %794 = vmatpush1.bf16.msra.mxu0 %v546
        %795 = vmatprep.subr.bf16.mxu0 %v545
        %796 = vmatpush1.bf16.msra.mxu0 %v544
        %797 = vmatprep.subr.bf16.mxu0 %v543
        %798 = vmatpush1.bf16.msra.mxu0 %v542
        %799 = vmatprep.subr.bf16.mxu0 %v541
        %800 = vmatpush1.bf16.msra.mxu0 %v540
        %801 = vmatprep.subr.bf16.mxu0 %v539
        %802 = vmatpush1.bf16.msra.mxu0 %v538
        %803 = vmatprep.subr.bf16.mxu0 %v537
        %804 = vmatpush1.bf16.msra.mxu0 %v536
        %805 = vmatprep.subr.bf16.mxu0 %v535
        %806 = vmatpush1.bf16.msra.mxu0 %v534
        %807 = vmatprep.subr.bf16.mxu0 0
        %808 = vmatpush2.bf16.msra.mxu0 0
        %809 = vmatprep.subr.bf16.mxu0 0
        %810 = vmatpush2.bf16.msra.mxu0 0
        %811 = vmatprep.subr.bf16.mxu0 0
        %812 = vmatpush2.bf16.msra.mxu0 0
        %813 = vmatprep.subr.bf16.mxu0 0
        %814 = vmatpush2.bf16.msra.mxu0 0
        %815 = vmatprep.subr.bf16.mxu0 0
        %816 = vmatpush2.bf16.msra.mxu0 0
        %817 = vmatprep.subr.bf16.mxu0 0
        %818 = vmatpush2.bf16.msra.mxu0 0
        %819 = vmatprep.subr.bf16.mxu0 0
        %820 = vmatpush2.bf16.msra.mxu0 0
        %821 = vmatprep.subr.bf16.mxu0 0
        %822 = vmatpush2.bf16.msra.mxu0 0
        %823 = vmatprep.mubr.bf16.mxu0 0
        %824 = vmatmul.mubr.bf16.gmra.mxu0 %v264
        %v825 = vpop.f32.mrf.mxu0
        %v826 = vadd.f32 %v633, %v825
        %v827 = vpop.f32.mrf.mxu0
        %v828 = vadd.f32 %v635, %v827
        %v829 = vpop.f32.mrf.mxu0
        %v830 = vadd.f32 %v637, %v829
        %v831 = vpop.f32.mrf.mxu0
        %v832 = vadd.f32 %v639, %v831
        %833 = vmatprep.mubr.bf16.mxu0 0
        %834 = vmatmul.mubr.bf16.gmra.mxu0 %v267
        %v835 = vpop.f32.mrf.mxu0
        %v836 = vadd.f32 %v643, %v835
        %v837 = vpop.f32.mrf.mxu0
        %v838 = vadd.f32 %v645, %v837
        %v839 = vpop.f32.mrf.mxu0
        %v840 = vadd.f32 %v647, %v839
        %v841 = vpop.f32.mrf.mxu0
        %v842 = vadd.f32 %v649, %v841
        %843 = vmatprep.mubr.bf16.mxu0 0
        %844 = vmatmul.mubr.bf16.gmra.mxu0 %v270
        %v845 = vpop.f32.mrf.mxu0
        %v846 = vadd.f32 %v653, %v845
        %v847 = vpop.f32.mrf.mxu0
        %v848 = vadd.f32 %v655, %v847
        %v849 = vpop.f32.mrf.mxu0
        %v850 = vadd.f32 %v657, %v849
        %v851 = vpop.f32.mrf.mxu0
        %v852 = vadd.f32 %v659, %v851
        %853 = vmatprep.mubr.bf16.mxu0 0
        %854 = vmatmul.mubr.bf16.gmra.mxu0 %v273
        %v855 = vpop.f32.mrf.mxu0
        %v856 = vadd.f32 %v663, %v855
        %v857 = vpop.f32.mrf.mxu0
        %v858 = vadd.f32 %v665, %v857
        %v859 = vpop.f32.mrf.mxu0
        %v860 = vadd.f32 %v667, %v859
        %v861 = vpop.f32.mrf.mxu0
        %v862 = vadd.f32 %v669, %v861
        %863 = vmatprep.mubr.bf16.mxu0 0
        %864 = vmatmul.mubr.bf16.gmra.mxu0 %v276
        %v865 = vpop.f32.mrf.mxu0
        %v866 = vadd.f32 %v673, %v865
        %v867 = vpop.f32.mrf.mxu0
        %v868 = vadd.f32 %v675, %v867
        %v869 = vpop.f32.mrf.mxu0
        %v870 = vadd.f32 %v677, %v869
        %v871 = vpop.f32.mrf.mxu0
        %v872 = vadd.f32 %v679, %v871
        %873 = vmatprep.mubr.bf16.mxu0 0
        %874 = vmatmul.mubr.bf16.gmra.mxu0 %v279
        %v875 = vpop.f32.mrf.mxu0
        %v876 = vadd.f32 %v683, %v875
        %v877 = vpop.f32.mrf.mxu0
        %v878 = vadd.f32 %v685, %v877
        %v879 = vpop.f32.mrf.mxu0
        %v880 = vadd.f32 %v687, %v879
        %v881 = vpop.f32.mrf.mxu0
        %v882 = vadd.f32 %v689, %v881
        %883 = vmatprep.mubr.bf16.mxu0 0
        %884 = vmatmul.mubr.bf16.gmra.mxu0 %v282
        %v885 = vpop.f32.mrf.mxu0
        %v886 = vadd.f32 %v693, %v885
        %v887 = vpop.f32.mrf.mxu0
        %v888 = vadd.f32 %v695, %v887
        %v889 = vpop.f32.mrf.mxu0
        %v890 = vadd.f32 %v697, %v889
        %v891 = vpop.f32.mrf.mxu0
        %v892 = vadd.f32 %v699, %v891
        %893 = vmatprep.mubr.bf16.mxu0 0
        %894 = vmatmul.mubr.bf16.gmra.mxu0 %v285
        %v895 = vpop.f32.mrf.mxu0
        %v896 = vadd.f32 %v703, %v895
        %v897 = vpop.f32.mrf.mxu0
        %v898 = vadd.f32 %v705, %v897
        %v899 = vpop.f32.mrf.mxu0
        %v900 = vadd.f32 %v707, %v899
        %v901 = vpop.f32.mrf.mxu0
        %v902 = vadd.f32 %v709, %v901
        %903 = vmatprep.mubr.bf16.mxu0 0
        %904 = vmatmul.mubr.bf16.gmra.mxu0 %v288
        %v905 = vpop.f32.mrf.mxu0
        %v906 = vadd.f32 %v713, %v905
        %v907 = vpop.f32.mrf.mxu0
        %v908 = vadd.f32 %v715, %v907
        %v909 = vpop.f32.mrf.mxu0
        %v910 = vadd.f32 %v717, %v909
        %v911 = vpop.f32.mrf.mxu0
        %v912 = vadd.f32 %v719, %v911
        %913 = vmatprep.mubr.bf16.mxu0 0
        %914 = vmatmul.mubr.bf16.gmra.mxu0 %v291
        %v915 = vpop.f32.mrf.mxu0
        %v916 = vadd.f32 %v723, %v915
        %v917 = vpop.f32.mrf.mxu0
        %v918 = vadd.f32 %v725, %v917
        %v919 = vpop.f32.mrf.mxu0
        %v920 = vadd.f32 %v727, %v919
        %v921 = vpop.f32.mrf.mxu0
        %v922 = vadd.f32 %v729, %v921
        %923 = vmatprep.mubr.bf16.mxu0 0
        %924 = vmatmul.mubr.bf16.gmra.mxu0 %v294
        %v925 = vpop.f32.mrf.mxu0
        %v926 = vadd.f32 %v733, %v925
        %v927 = vpop.f32.mrf.mxu0
        %v928 = vadd.f32 %v735, %v927
        %v929 = vpop.f32.mrf.mxu0
        %v930 = vadd.f32 %v737, %v929
        %v931 = vpop.f32.mrf.mxu0
        %v932 = vadd.f32 %v739, %v931
        %933 = vmatprep.mubr.bf16.mxu0 0
        %934 = vmatmul.mubr.bf16.gmra.mxu0 %v297
        %v935 = vpop.f32.mrf.mxu0
        %v936 = vadd.f32 %v743, %v935
        %v937 = vpop.f32.mrf.mxu0
        %v938 = vadd.f32 %v745, %v937
        %v939 = vpop.f32.mrf.mxu0
        %v940 = vadd.f32 %v747, %v939
        %v941 = vpop.f32.mrf.mxu0
        %v942 = vadd.f32 %v749, %v941
        %943 = vmatprep.mubr.bf16.mxu0 0
        %944 = vmatmul.mubr.bf16.gmra.mxu0 %v300
        %v945 = vpop.f32.mrf.mxu0
        %v946 = vadd.f32 %v753, %v945
        %v947 = vpop.f32.mrf.mxu0
        %v948 = vadd.f32 %v755, %v947
        %v949 = vpop.f32.mrf.mxu0
        %v950 = vadd.f32 %v757, %v949
        %v951 = vpop.f32.mrf.mxu0
        %v952 = vadd.f32 %v759, %v951
        %953 = vmatprep.mubr.bf16.mxu0 0
        %954 = vmatmul.mubr.bf16.gmra.mxu0 %v303
        %v955 = vpop.f32.mrf.mxu0
        %v956 = vadd.f32 %v763, %v955
        %v957 = vpop.f32.mrf.mxu0
        %v958 = vadd.f32 %v765, %v957
        %v959 = vpop.f32.mrf.mxu0
        %v960 = vadd.f32 %v767, %v959
        %v961 = vpop.f32.mrf.mxu0
        %v962 = vadd.f32 %v769, %v961
        %963 = vmatprep.mubr.bf16.mxu0 0
        %964 = vmatmul.mubr.bf16.gmra.mxu0 %v306
        %v965 = vpop.f32.mrf.mxu0
        %v966 = vadd.f32 %v773, %v965
        %v967 = vpop.f32.mrf.mxu0
        %v968 = vadd.f32 %v775, %v967
        %v969 = vpop.f32.mrf.mxu0
        %v970 = vadd.f32 %v777, %v969
        %v971 = vpop.f32.mrf.mxu0
        %v972 = vadd.f32 %v779, %v971
        %973 = vmatprep.mubr.bf16.mxu0 0
        %974 = vmatmul.mubr.bf16.gmra.mxu0 %v309
        %v975 = vpop.f32.mrf.mxu0
        %v976 = vadd.f32 %v783, %v975
        %v977 = vpop.f32.mrf.mxu0
        %v978 = vadd.f32 %v785, %v977
        %v979 = vpop.f32.mrf.mxu0
        %v980 = vadd.f32 %v787, %v979
        %v981 = vpop.f32.mrf.mxu0
        %v982 = vadd.f32 %v789, %v981
        %983 = vdwg.mxu0
        %v984 = vpack.c.bf16 %v830, %v826
        %v985 = vpack.c.bf16 %v840, %v836
        %v986 = vpack.c.bf16 %v850, %v846
        %v987 = vpack.c.bf16 %v860, %v856
        %v988 = vpack.c.bf16 %v870, %v866
        %v989 = vpack.c.bf16 %v880, %v876
        %v990 = vpack.c.bf16 %v890, %v886
        %v991 = vpack.c.bf16 %v900, %v896
        %v992 = vpack.c.bf16 %v910, %v906
        %v993 = vpack.c.bf16 %v920, %v916
        %v994 = vpack.c.bf16 %v930, %v926
        %v995 = vpack.c.bf16 %v940, %v936
        %v996 = vpack.c.bf16 %v950, %v946
        %v997 = vpack.c.bf16 %v960, %v956
        %v998 = vpack.c.bf16 %v970, %v966
        %v999 = vpack.c.bf16 %v980, %v976
        %1004 = vrot.lane.b32.xlu0 %v984, 64
        %v1005 = vpop.permute.xlu0 %1004
        %1006 = vrot.lane.b32.xlu0 %v985, 64
        %v1007 = vpop.permute.xlu0 %1006
        %1008 = vrot.lane.b32.xlu0 %v986, 64
        %v1009 = vpop.permute.xlu0 %1008
        %1010 = vrot.lane.b32.xlu0 %v987, 64
        %v1011 = vpop.permute.xlu0 %1010
        %vm1012 = vcmask 523264
        %v1014 = vsel %vm1012, %v984, 0
        %v1017 = vsel %vm1012, %v985, 0
        %v1020 = vsel %vm1012, %v986, 0
        %v1023 = vsel %vm1012, %v987, 0
        %v1026 = vsel %vm1012, %v1005, 0
        %v1029 = vsel %vm1012, %v1007, 0
        %v1032 = vsel %vm1012, %v1009, 0
        %v1035 = vsel %vm1012, %v1011, 0
        %1037 = vmatprep.subr.bf16.mxu0 0
        %1038 = vmatpush1.bf16.xpose.msra.mxu0 0
        %1039 = vmatprep.subr.bf16.mxu0 0
        %1040 = vmatpush1.bf16.xpose.msra.mxu0 0
        %1041 = vmatprep.subr.bf16.mxu0 0
        %1042 = vmatpush1.bf16.xpose.msra.mxu0 0
        %1043 = vmatprep.subr.bf16.mxu0 0
        %1044 = vmatpush1.bf16.xpose.msra.mxu0 0
        %1045 = vmatprep.subr.bf16.mxu0 0
        %1046 = vmatpush1.bf16.xpose.msra.mxu0 %v1035
        %1047 = vmatprep.subr.bf16.mxu0 0
        %1048 = vmatpush1.bf16.xpose.msra.mxu0 %v1032
        %1049 = vmatprep.subr.bf16.mxu0 0
        %1050 = vmatpush1.bf16.xpose.msra.mxu0 %v1029
        %1051 = vmatprep.subr.bf16.mxu0 0
        %1052 = vmatpush1.bf16.xpose.msra.mxu0 %v1026
        %1053 = vmatprep.subr.bf16.mxu0 0
        %1054 = vmatpush2.bf16.xpose.msra.mxu0 0
        %1055 = vmatprep.subr.bf16.mxu0 0
        %1056 = vmatpush2.bf16.xpose.msra.mxu0 0
        %1057 = vmatprep.subr.bf16.mxu0 0
        %1058 = vmatpush2.bf16.xpose.msra.mxu0 0
        %1059 = vmatprep.subr.bf16.mxu0 0
        %1060 = vmatpush2.bf16.xpose.msra.mxu0 0
        %1061 = vmatprep.subr.bf16.mxu0 0
        %1062 = vmatpush2.bf16.xpose.msra.mxu0 0
        %1063 = vmatprep.subr.bf16.mxu0 0
        %1064 = vmatpush2.bf16.xpose.msra.mxu0 0
        %1065 = vmatprep.subr.bf16.mxu0 0
        %1066 = vmatpush2.bf16.xpose.msra.mxu0 0
        %1067 = vmatprep.subr.bf16.mxu0 0
        %1068 = vmatpush2.bf16.xpose.msra.mxu0 0
        %1069 = vmatprep.mubr.bf16.mxu0 0
        %1070 = vmatmul.mubr.bf16.gmra.mxu0 %v1014
        %v1071 = vpop.f32.mrf.mxu0
        %v1072 = vadd.f32 0.0, %v1071
        %v1073 = vpop.f32.mrf.mxu0
        %v1074 = vpop.f32.mrf.mxu0
        %v1075 = vadd.f32 0.0, %v1074
        %v1076 = vpop.f32.mrf.mxu0
        %1077 = vmatprep.mubr.bf16.mxu0 0
        %1078 = vmatmul.mubr.bf16.gmra.mxu0 %v1017
        %v1079 = vpop.f32.mrf.mxu0
        %v1080 = vadd.f32 0.0, %v1079
        %v1081 = vpop.f32.mrf.mxu0
        %v1082 = vpop.f32.mrf.mxu0
        %v1083 = vadd.f32 0.0, %v1082
        %v1084 = vpop.f32.mrf.mxu0
        %1085 = vmatprep.mubr.bf16.mxu0 0
        %1086 = vmatmul.mubr.bf16.gmra.mxu0 %v1020
        %v1087 = vpop.f32.mrf.mxu0
        %v1088 = vadd.f32 0.0, %v1087
        %v1089 = vpop.f32.mrf.mxu0
        %v1090 = vpop.f32.mrf.mxu0
        %v1091 = vadd.f32 0.0, %v1090
        %v1092 = vpop.f32.mrf.mxu0
        %1093 = vmatprep.mubr.bf16.mxu0 0
        %1094 = vmatmul.mubr.bf16.gmra.mxu0 %v1023
        %v1095 = vpop.f32.mrf.mxu0
        %v1096 = vadd.f32 0.0, %v1095
        %v1097 = vpop.f32.mrf.mxu0
        %v1098 = vpop.f32.mrf.mxu0
        %v1099 = vadd.f32 0.0, %v1098
        %v1100 = vpop.f32.mrf.mxu0
        %1101 = vdwg.mxu0
        %1106 = vrot.lane.b32.xlu0 %v988, 64
        %v1107 = vpop.permute.xlu0 %1106
        %1108 = vrot.lane.b32.xlu0 %v989, 64
        %v1109 = vpop.permute.xlu0 %1108
        %1110 = vrot.lane.b32.xlu0 %v990, 64
        %v1111 = vpop.permute.xlu0 %1110
        %1112 = vrot.lane.b32.xlu0 %v991, 64
        %v1113 = vpop.permute.xlu0 %1112
        %v1115 = vsel %vm1012, %v988, 0
        %v1118 = vsel %vm1012, %v989, 0
        %v1121 = vsel %vm1012, %v990, 0
        %v1124 = vsel %vm1012, %v991, 0
        %v1127 = vsel %vm1012, %v1107, 0
        %v1130 = vsel %vm1012, %v1109, 0
        %v1133 = vsel %vm1012, %v1111, 0
        %v1136 = vsel %vm1012, %v1113, 0
        %1138 = vmatprep.subr.bf16.mxu0 0
        %1139 = vmatpush1.bf16.xpose.msra.mxu0 0
        %1140 = vmatprep.subr.bf16.mxu0 0
        %1141 = vmatpush1.bf16.xpose.msra.mxu0 0
        %1142 = vmatprep.subr.bf16.mxu0 0
        %1143 = vmatpush1.bf16.xpose.msra.mxu0 0
        %1144 = vmatprep.subr.bf16.mxu0 0
        %1145 = vmatpush1.bf16.xpose.msra.mxu0 0
        %1146 = vmatprep.subr.bf16.mxu0 0
        %1147 = vmatpush1.bf16.xpose.msra.mxu0 %v1136
        %1148 = vmatprep.subr.bf16.mxu0 0
        %1149 = vmatpush1.bf16.xpose.msra.mxu0 %v1133
        %1150 = vmatprep.subr.bf16.mxu0 0
        %1151 = vmatpush1.bf16.xpose.msra.mxu0 %v1130
        %1152 = vmatprep.subr.bf16.mxu0 0
        %1153 = vmatpush1.bf16.xpose.msra.mxu0 %v1127
        %1154 = vmatprep.subr.bf16.mxu0 0
        %1155 = vmatpush2.bf16.xpose.msra.mxu0 0
        %1156 = vmatprep.subr.bf16.mxu0 0
        %1157 = vmatpush2.bf16.xpose.msra.mxu0 0
        %1158 = vmatprep.subr.bf16.mxu0 0
        %1159 = vmatpush2.bf16.xpose.msra.mxu0 0
        %1160 = vmatprep.subr.bf16.mxu0 0
        %1161 = vmatpush2.bf16.xpose.msra.mxu0 0
        %1162 = vmatprep.subr.bf16.mxu0 0
        %1163 = vmatpush2.bf16.xpose.msra.mxu0 0
        %1164 = vmatprep.subr.bf16.mxu0 0
        %1165 = vmatpush2.bf16.xpose.msra.mxu0 0
        %1166 = vmatprep.subr.bf16.mxu0 0
        %1167 = vmatpush2.bf16.xpose.msra.mxu0 0
        %1168 = vmatprep.subr.bf16.mxu0 0
        %1169 = vmatpush2.bf16.xpose.msra.mxu0 0
        %1170 = vmatprep.mubr.bf16.mxu0 0
        %1171 = vmatmul.mubr.bf16.gmra.mxu0 %v1115
        %v1172 = vpop.f32.mrf.mxu0
        %v1173 = vadd.f32 0.0, %v1172
        %v1174 = vpop.f32.mrf.mxu0
        %v1175 = vpop.f32.mrf.mxu0
        %v1176 = vadd.f32 0.0, %v1175
        %v1177 = vpop.f32.mrf.mxu0
        %1178 = vmatprep.mubr.bf16.mxu0 0
        %1179 = vmatmul.mubr.bf16.gmra.mxu0 %v1118
        %v1180 = vpop.f32.mrf.mxu0
        %v1181 = vadd.f32 0.0, %v1180
        %v1182 = vpop.f32.mrf.mxu0
        %v1183 = vpop.f32.mrf.mxu0
        %v1184 = vadd.f32 0.0, %v1183
        %v1185 = vpop.f32.mrf.mxu0
        %1186 = vmatprep.mubr.bf16.mxu0 0
        %1187 = vmatmul.mubr.bf16.gmra.mxu0 %v1121
        %v1188 = vpop.f32.mrf.mxu0
        %v1189 = vadd.f32 0.0, %v1188
        %v1190 = vpop.f32.mrf.mxu0
        %v1191 = vpop.f32.mrf.mxu0
        %v1192 = vadd.f32 0.0, %v1191
        %v1193 = vpop.f32.mrf.mxu0
        %1194 = vmatprep.mubr.bf16.mxu0 0
        %1195 = vmatmul.mubr.bf16.gmra.mxu0 %v1124
        %v1196 = vpop.f32.mrf.mxu0
        %v1197 = vadd.f32 0.0, %v1196
        %v1198 = vpop.f32.mrf.mxu0
        %v1199 = vpop.f32.mrf.mxu0
        %v1200 = vadd.f32 0.0, %v1199
        %v1201 = vpop.f32.mrf.mxu0
        %1202 = vdwg.mxu0
        %1207 = vrot.lane.b32.xlu0 %v992, 64
        %v1208 = vpop.permute.xlu0 %1207
        %1209 = vrot.lane.b32.xlu0 %v993, 64
        %v1210 = vpop.permute.xlu0 %1209
        %1211 = vrot.lane.b32.xlu0 %v994, 64
        %v1212 = vpop.permute.xlu0 %1211
        %1213 = vrot.lane.b32.xlu0 %v995, 64
        %v1214 = vpop.permute.xlu0 %1213
        %v1216 = vsel %vm1012, %v992, 0
        %v1219 = vsel %vm1012, %v993, 0
        %v1222 = vsel %vm1012, %v994, 0
        %v1225 = vsel %vm1012, %v995, 0
        %v1228 = vsel %vm1012, %v1208, 0
        %v1231 = vsel %vm1012, %v1210, 0
        %v1234 = vsel %vm1012, %v1212, 0
        %v1237 = vsel %vm1012, %v1214, 0
        %1239 = vmatprep.subr.bf16.mxu0 0
        %1240 = vmatpush1.bf16.xpose.msra.mxu0 0
        %1241 = vmatprep.subr.bf16.mxu0 0
        %1242 = vmatpush1.bf16.xpose.msra.mxu0 0
        %1243 = vmatprep.subr.bf16.mxu0 0
        %1244 = vmatpush1.bf16.xpose.msra.mxu0 0
        %1245 = vmatprep.subr.bf16.mxu0 0
        %1246 = vmatpush1.bf16.xpose.msra.mxu0 0
        %1247 = vmatprep.subr.bf16.mxu0 0
        %1248 = vmatpush1.bf16.xpose.msra.mxu0 %v1237
        %1249 = vmatprep.subr.bf16.mxu0 0
        %1250 = vmatpush1.bf16.xpose.msra.mxu0 %v1234
        %1251 = vmatprep.subr.bf16.mxu0 0
        %1252 = vmatpush1.bf16.xpose.msra.mxu0 %v1231
        %1253 = vmatprep.subr.bf16.mxu0 0
        %1254 = vmatpush1.bf16.xpose.msra.mxu0 %v1228
        %1255 = vmatprep.subr.bf16.mxu0 0
        %1256 = vmatpush2.bf16.xpose.msra.mxu0 0
        %1257 = vmatprep.subr.bf16.mxu0 0
        %1258 = vmatpush2.bf16.xpose.msra.mxu0 0
        %1259 = vmatprep.subr.bf16.mxu0 0
        %1260 = vmatpush2.bf16.xpose.msra.mxu0 0
        %1261 = vmatprep.subr.bf16.mxu0 0
        %1262 = vmatpush2.bf16.xpose.msra.mxu0 0
        %1263 = vmatprep.subr.bf16.mxu0 0
        %1264 = vmatpush2.bf16.xpose.msra.mxu0 0
        %1265 = vmatprep.subr.bf16.mxu0 0
        %1266 = vmatpush2.bf16.xpose.msra.mxu0 0
        %1267 = vmatprep.subr.bf16.mxu0 0
        %1268 = vmatpush2.bf16.xpose.msra.mxu0 0
        %1269 = vmatprep.subr.bf16.mxu0 0
        %1270 = vmatpush2.bf16.xpose.msra.mxu0 0
        %1271 = vmatprep.mubr.bf16.mxu0 0
        %1272 = vmatmul.mubr.bf16.gmra.mxu0 %v1216
        %v1273 = vpop.f32.mrf.mxu0
        %v1274 = vadd.f32 0.0, %v1273
        %v1275 = vpop.f32.mrf.mxu0
        %v1276 = vpop.f32.mrf.mxu0
        %v1277 = vadd.f32 0.0, %v1276
        %v1278 = vpop.f32.mrf.mxu0
        %1279 = vmatprep.mubr.bf16.mxu0 0
        %1280 = vmatmul.mubr.bf16.gmra.mxu0 %v1219
        %v1281 = vpop.f32.mrf.mxu0
        %v1282 = vadd.f32 0.0, %v1281
        %v1283 = vpop.f32.mrf.mxu0
        %v1284 = vpop.f32.mrf.mxu0
        %v1285 = vadd.f32 0.0, %v1284
        %v1286 = vpop.f32.mrf.mxu0
        %1287 = vmatprep.mubr.bf16.mxu0 0
        %1288 = vmatmul.mubr.bf16.gmra.mxu0 %v1222
        %v1289 = vpop.f32.mrf.mxu0
        %v1290 = vadd.f32 0.0, %v1289
        %v1291 = vpop.f32.mrf.mxu0
        %v1292 = vpop.f32.mrf.mxu0
        %v1293 = vadd.f32 0.0, %v1292
        %v1294 = vpop.f32.mrf.mxu0
        %1295 = vmatprep.mubr.bf16.mxu0 0
        %1296 = vmatmul.mubr.bf16.gmra.mxu0 %v1225
        %v1297 = vpop.f32.mrf.mxu0
        %v1298 = vadd.f32 0.0, %v1297
        %v1299 = vpop.f32.mrf.mxu0
        %v1300 = vpop.f32.mrf.mxu0
        %v1301 = vadd.f32 0.0, %v1300
        %v1302 = vpop.f32.mrf.mxu0
        %1303 = vdwg.mxu0
        %1308 = vrot.lane.b32.xlu0 %v996, 64
        %v1309 = vpop.permute.xlu0 %1308
        %1310 = vrot.lane.b32.xlu0 %v997, 64
        %v1311 = vpop.permute.xlu0 %1310
        %1312 = vrot.lane.b32.xlu0 %v998, 64
        %v1313 = vpop.permute.xlu0 %1312
        %1314 = vrot.lane.b32.xlu0 %v999, 64
        %v1315 = vpop.permute.xlu0 %1314
        %v1317 = vsel %vm1012, %v996, 0
        %v1320 = vsel %vm1012, %v997, 0
        %v1323 = vsel %vm1012, %v998, 0
        %v1326 = vsel %vm1012, %v999, 0
        %v1329 = vsel %vm1012, %v1309, 0
        %v1332 = vsel %vm1012, %v1311, 0
        %v1335 = vsel %vm1012, %v1313, 0
        %v1338 = vsel %vm1012, %v1315, 0
        %1340 = vmatprep.subr.bf16.mxu0 0
        %1341 = vmatpush1.bf16.xpose.msra.mxu0 0
        %1342 = vmatprep.subr.bf16.mxu0 0
        %1343 = vmatpush1.bf16.xpose.msra.mxu0 0
        %1344 = vmatprep.subr.bf16.mxu0 0
        %1345 = vmatpush1.bf16.xpose.msra.mxu0 0
        %1346 = vmatprep.subr.bf16.mxu0 0
        %1347 = vmatpush1.bf16.xpose.msra.mxu0 0
        %1348 = vmatprep.subr.bf16.mxu0 0
        %1349 = vmatpush1.bf16.xpose.msra.mxu0 %v1338
        %1350 = vmatprep.subr.bf16.mxu0 0
        %1351 = vmatpush1.bf16.xpose.msra.mxu0 %v1335
        %1352 = vmatprep.subr.bf16.mxu0 0
        %1353 = vmatpush1.bf16.xpose.msra.mxu0 %v1332
        %1354 = vmatprep.subr.bf16.mxu0 0
        %1355 = vmatpush1.bf16.xpose.msra.mxu0 %v1329
        %1356 = vmatprep.subr.bf16.mxu0 0
        %1357 = vmatpush2.bf16.xpose.msra.mxu0 0
        %1358 = vmatprep.subr.bf16.mxu0 0
        %1359 = vmatpush2.bf16.xpose.msra.mxu0 0
        %1360 = vmatprep.subr.bf16.mxu0 0
        %1361 = vmatpush2.bf16.xpose.msra.mxu0 0
        %1362 = vmatprep.subr.bf16.mxu0 0
        %1363 = vmatpush2.bf16.xpose.msra.mxu0 0
        %1364 = vmatprep.subr.bf16.mxu0 0
        %1365 = vmatpush2.bf16.xpose.msra.mxu0 0
        %1366 = vmatprep.subr.bf16.mxu0 0
        %1367 = vmatpush2.bf16.xpose.msra.mxu0 0
        %1368 = vmatprep.subr.bf16.mxu0 0
        %1369 = vmatpush2.bf16.xpose.msra.mxu0 0
        %1370 = vmatprep.subr.bf16.mxu0 0
        %1371 = vmatpush2.bf16.xpose.msra.mxu0 0
        %1372 = vmatprep.mubr.bf16.mxu0 0
        %1373 = vmatmul.mubr.bf16.gmra.mxu0 %v1317
        %v1374 = vpop.f32.mrf.mxu0
        %v1375 = vadd.f32 0.0, %v1374
        %v1376 = vpop.f32.mrf.mxu0
        %v1377 = vpop.f32.mrf.mxu0
        %v1378 = vadd.f32 0.0, %v1377
        %v1379 = vpop.f32.mrf.mxu0
        %1380 = vmatprep.mubr.bf16.mxu0 0
        %1381 = vmatmul.mubr.bf16.gmra.mxu0 %v1320
        %v1382 = vpop.f32.mrf.mxu0
        %v1383 = vadd.f32 0.0, %v1382
        %v1384 = vpop.f32.mrf.mxu0
        %v1385 = vpop.f32.mrf.mxu0
        %v1386 = vadd.f32 0.0, %v1385
        %v1387 = vpop.f32.mrf.mxu0
        %1388 = vmatprep.mubr.bf16.mxu0 0
        %1389 = vmatmul.mubr.bf16.gmra.mxu0 %v1323
        %v1390 = vpop.f32.mrf.mxu0
        %v1391 = vadd.f32 0.0, %v1390
        %v1392 = vpop.f32.mrf.mxu0
        %v1393 = vpop.f32.mrf.mxu0
        %v1394 = vadd.f32 0.0, %v1393
        %v1395 = vpop.f32.mrf.mxu0
        %1396 = vmatprep.mubr.bf16.mxu0 0
        %1397 = vmatmul.mubr.bf16.gmra.mxu0 %v1326
        %v1398 = vpop.f32.mrf.mxu0
        %v1399 = vadd.f32 0.0, %v1398
        %v1400 = vpop.f32.mrf.mxu0
        %v1401 = vpop.f32.mrf.mxu0
        %v1402 = vadd.f32 0.0, %v1401
        %v1403 = vpop.f32.mrf.mxu0
        %1404 = vdwg.mxu0
        %v1405 = vlaneseq
        %v1406 = vshrl.u32 %v1405, 7
        %v1407 = vadd.s32 %v1406, 8
        %v1408 = vadd.s32 %v1406, 16
        %v1409 = vadd.s32 %v1406, 24
        %v1410 = vadd.s32 %v1406, 32
        %v1411 = vadd.s32 %v1406, 40
        %v1412 = vadd.s32 %v1406, 48
        %v1413 = vadd.s32 %v1406, 56
        %v1414 = vlaneseq
        %v1415 = vand.u32 %v1414, 127
        %vm1416 = vcmp.le.s32.totalorder %v1415, %v1406
        %vm1417 = vcmp.le.s32.totalorder %v1415, %v1407
        %vm1418 = vcmp.le.s32.totalorder %v1415, %v1408
        %vm1419 = vcmp.le.s32.totalorder %v1415, %v1409
        %vm1420 = vcmp.le.s32.totalorder %v1415, %v1410
        %vm1421 = vcmp.le.s32.totalorder %v1415, %v1411
        %vm1422 = vcmp.le.s32.totalorder %v1415, %v1412
        %vm1423 = vcmp.le.s32.totalorder %v1415, %v1413
        %v1424 = vsel %vm1416, 1, 0
        %v1425 = vsel %vm1417, 1, 0
        %v1426 = vsel %vm1418, 1, 0
        %v1427 = vsel %vm1419, 1, 0
        %v1428 = vsel %vm1420, 1, 0
        %v1429 = vsel %vm1421, 1, 0
        %v1430 = vsel %vm1422, 1, 0
        %v1431 = vsel %vm1423, 1, 0
        %vm1432 = vcmp.eq.s32.totalorder %v1424, 1
        %vm1433 = vcmp.eq.s32.totalorder %v1425, 1
        %vm1434 = vcmp.eq.s32.totalorder %v1426, 1
        %vm1435 = vcmp.eq.s32.totalorder %v1427, 1
        %vm1436 = vcmp.eq.s32.totalorder %v1428, 1
        %vm1437 = vcmp.eq.s32.totalorder %v1429, 1
        %vm1438 = vcmp.eq.s32.totalorder %v1430, 1
        %vm1439 = vcmp.eq.s32.totalorder %v1431, 1
        %v1440 = vsel %vm1432, %v1072, -inf
        %v1441 = vsel %vm1433, %v1075, -inf
        %v1442 = vsel %vm1434, %v1080, -inf
        %v1443 = vsel %vm1435, %v1083, -inf
        %v1444 = vsel %vm1436, %v1088, -inf
        %v1445 = vsel %vm1437, %v1091, -inf
        %v1446 = vsel %vm1438, %v1096, -inf
        %v1447 = vsel %vm1439, %v1099, -inf
        %v1448 = vsel %vm1432, %v1173, -inf
        %v1449 = vsel %vm1433, %v1176, -inf
        %v1450 = vsel %vm1434, %v1181, -inf
        %v1451 = vsel %vm1435, %v1184, -inf
        %v1452 = vsel %vm1436, %v1189, -inf
        %v1453 = vsel %vm1437, %v1192, -inf
        %v1454 = vsel %vm1438, %v1197, -inf
        %v1455 = vsel %vm1439, %v1200, -inf
        %v1456 = vsel %vm1432, %v1274, -inf
        %v1457 = vsel %vm1433, %v1277, -inf
        %v1458 = vsel %vm1434, %v1282, -inf
        %v1459 = vsel %vm1435, %v1285, -inf
        %v1460 = vsel %vm1436, %v1290, -inf
        %v1461 = vsel %vm1437, %v1293, -inf
        %v1462 = vsel %vm1438, %v1298, -inf
        %v1463 = vsel %vm1439, %v1301, -inf
        %v1464 = vsel %vm1432, %v1375, -inf
        %v1465 = vsel %vm1433, %v1378, -inf
        %v1466 = vsel %vm1434, %v1383, -inf
        %v1467 = vsel %vm1435, %v1386, -inf
        %v1468 = vsel %vm1436, %v1391, -inf
        %v1469 = vsel %vm1437, %v1394, -inf
        %v1470 = vsel %vm1438, %v1399, -inf
        %v1471 = vsel %vm1439, %v1402, -inf
        %v1472 = vsel %vm1012, %v1440, -inf
        %1473 = vmax.xlane.f32.xlu0 %v1472
        %v1474 = vpop.xlane.xlu0 %1473
        %v1475 = vsel %vm1012, %v1441, -inf
        %1476 = vmax.xlane.f32.xlu0 %v1475
        %v1477 = vpop.xlane.xlu0 %1476
        %v1478 = vsel %vm1012, %v1442, -inf
        %1479 = vmax.xlane.f32.xlu0 %v1478
        %v1480 = vpop.xlane.xlu0 %1479
        %v1481 = vsel %vm1012, %v1443, -inf
        %1482 = vmax.xlane.f32.xlu0 %v1481
        %v1483 = vpop.xlane.xlu0 %1482
        %v1484 = vsel %vm1012, %v1444, -inf
        %1485 = vmax.xlane.f32.xlu0 %v1484
        %v1486 = vpop.xlane.xlu0 %1485
        %v1487 = vsel %vm1012, %v1445, -inf
        %1488 = vmax.xlane.f32.xlu0 %v1487
        %v1489 = vpop.xlane.xlu0 %1488
        %v1490 = vsel %vm1012, %v1446, -inf
        %1491 = vmax.xlane.f32.xlu0 %v1490
        %v1492 = vpop.xlane.xlu0 %1491
        %v1493 = vsel %vm1012, %v1447, -inf
        %1494 = vmax.xlane.f32.xlu0 %v1493
        %v1495 = vpop.xlane.xlu0 %1494
        %v1496 = vsel %vm1012, %v1448, -inf
        %1497 = vmax.xlane.f32.xlu0 %v1496
        %v1498 = vpop.xlane.xlu0 %1497
        %v1499 = vsel %vm1012, %v1449, -inf
        %1500 = vmax.xlane.f32.xlu0 %v1499
        %v1501 = vpop.xlane.xlu0 %1500
        %v1502 = vsel %vm1012, %v1450, -inf
        %1503 = vmax.xlane.f32.xlu0 %v1502
        %v1504 = vpop.xlane.xlu0 %1503
        %v1505 = vsel %vm1012, %v1451, -inf
        %1506 = vmax.xlane.f32.xlu0 %v1505
        %v1507 = vpop.xlane.xlu0 %1506
        %v1508 = vsel %vm1012, %v1452, -inf
        %1509 = vmax.xlane.f32.xlu0 %v1508
        %v1510 = vpop.xlane.xlu0 %1509
        %v1511 = vsel %vm1012, %v1453, -inf
        %1512 = vmax.xlane.f32.xlu0 %v1511
        %v1513 = vpop.xlane.xlu0 %1512
        %v1514 = vsel %vm1012, %v1454, -inf
        %1515 = vmax.xlane.f32.xlu0 %v1514
        %v1516 = vpop.xlane.xlu0 %1515
        %v1517 = vsel %vm1012, %v1455, -inf
        %1518 = vmax.xlane.f32.xlu0 %v1517
        %v1519 = vpop.xlane.xlu0 %1518
        %v1520 = vsel %vm1012, %v1456, -inf
        %1521 = vmax.xlane.f32.xlu0 %v1520
        %v1522 = vpop.xlane.xlu0 %1521
        %v1523 = vsel %vm1012, %v1457, -inf
        %1524 = vmax.xlane.f32.xlu0 %v1523
        %v1525 = vpop.xlane.xlu0 %1524
        %v1526 = vsel %vm1012, %v1458, -inf
        %1527 = vmax.xlane.f32.xlu0 %v1526
        %v1528 = vpop.xlane.xlu0 %1527
        %v1529 = vsel %vm1012, %v1459, -inf
        %1530 = vmax.xlane.f32.xlu0 %v1529
        %v1531 = vpop.xlane.xlu0 %1530
        %v1532 = vsel %vm1012, %v1460, -inf
        %1533 = vmax.xlane.f32.xlu0 %v1532
        %v1534 = vpop.xlane.xlu0 %1533
        %v1535 = vsel %vm1012, %v1461, -inf
        %1536 = vmax.xlane.f32.xlu0 %v1535
        %v1537 = vpop.xlane.xlu0 %1536
        %v1538 = vsel %vm1012, %v1462, -inf
        %1539 = vmax.xlane.f32.xlu0 %v1538
        %v1540 = vpop.xlane.xlu0 %1539
        %v1541 = vsel %vm1012, %v1463, -inf
        %1542 = vmax.xlane.f32.xlu0 %v1541
        %v1543 = vpop.xlane.xlu0 %1542
        %v1544 = vsel %vm1012, %v1464, -inf
        %1545 = vmax.xlane.f32.xlu0 %v1544
        %v1546 = vpop.xlane.xlu0 %1545
        %v1547 = vsel %vm1012, %v1465, -inf
        %1548 = vmax.xlane.f32.xlu0 %v1547
        %v1549 = vpop.xlane.xlu0 %1548
        %v1550 = vsel %vm1012, %v1466, -inf
        %1551 = vmax.xlane.f32.xlu0 %v1550
        %v1552 = vpop.xlane.xlu0 %1551
        %v1553 = vsel %vm1012, %v1467, -inf
        %1554 = vmax.xlane.f32.xlu0 %v1553
        %v1555 = vpop.xlane.xlu0 %1554
        %v1556 = vsel %vm1012, %v1468, -inf
        %1557 = vmax.xlane.f32.xlu0 %v1556
        %v1558 = vpop.xlane.xlu0 %1557
        %v1559 = vsel %vm1012, %v1469, -inf
        %1560 = vmax.xlane.f32.xlu0 %v1559
        %v1561 = vpop.xlane.xlu0 %1560
        %v1562 = vsel %vm1012, %v1470, -inf
        %1563 = vmax.xlane.f32.xlu0 %v1562
        %v1564 = vpop.xlane.xlu0 %1563
        %v1565 = vsel %vm1012, %v1471, -inf
        %1566 = vmax.xlane.f32.xlu0 %v1565
        %v1567 = vpop.xlane.xlu0 %1566
        %v1568 = vsub.f32 %v1440, %v1474
        %v1569 = vsub.f32 %v1441, %v1477
        %v1570 = vsub.f32 %v1442, %v1480
        %v1571 = vsub.f32 %v1443, %v1483
        %v1572 = vsub.f32 %v1444, %v1486
        %v1573 = vsub.f32 %v1445, %v1489
        %v1574 = vsub.f32 %v1446, %v1492
        %v1575 = vsub.f32 %v1447, %v1495
        %v1576 = vsub.f32 %v1448, %v1498
        %v1577 = vsub.f32 %v1449, %v1501
        %v1578 = vsub.f32 %v1450, %v1504
        %v1579 = vsub.f32 %v1451, %v1507
        %v1580 = vsub.f32 %v1452, %v1510
        %v1581 = vsub.f32 %v1453, %v1513
        %v1582 = vsub.f32 %v1454, %v1516
        %v1583 = vsub.f32 %v1455, %v1519
        %v1584 = vsub.f32 %v1456, %v1522
        %v1585 = vsub.f32 %v1457, %v1525
        %v1586 = vsub.f32 %v1458, %v1528
        %v1587 = vsub.f32 %v1459, %v1531
        %v1588 = vsub.f32 %v1460, %v1534
        %v1589 = vsub.f32 %v1461, %v1537
        %v1590 = vsub.f32 %v1462, %v1540
        %v1591 = vsub.f32 %v1463, %v1543
        %v1592 = vsub.f32 %v1464, %v1546
        %v1593 = vsub.f32 %v1465, %v1549
        %v1594 = vsub.f32 %v1466, %v1552
        %v1595 = vsub.f32 %v1467, %v1555
        %v1596 = vsub.f32 %v1468, %v1558
        %v1597 = vsub.f32 %v1469, %v1561
        %v1598 = vsub.f32 %v1470, %v1564
        %v1599 = vsub.f32 %v1471, %v1567
        %v1600 = vmul.f32 %v1568, 1.442695
        %v1601 = vpow.pop %v1600
        %v1602 = vmul.f32 %v1569, 1.442695
        %v1603 = vpow.pop %v1602
        %v1604 = vmul.f32 %v1570, 1.442695
        %v1605 = vpow.pop %v1604
        %v1606 = vmul.f32 %v1571, 1.442695
        %v1607 = vpow.pop %v1606
        %v1608 = vmul.f32 %v1572, 1.442695
        %v1609 = vpow.pop %v1608
        %v1610 = vmul.f32 %v1573, 1.442695
        %v1611 = vpow.pop %v1610
        %v1612 = vmul.f32 %v1574, 1.442695
        %v1613 = vpow.pop %v1612
        %v1614 = vmul.f32 %v1575, 1.442695
        %v1615 = vpow.pop %v1614
        %v1616 = vmul.f32 %v1576, 1.442695
        %v1617 = vpow.pop %v1616
        %v1618 = vmul.f32 %v1577, 1.442695
        %v1619 = vpow.pop %v1618
        %v1620 = vmul.f32 %v1578, 1.442695
        %v1621 = vpow.pop %v1620
        %v1622 = vmul.f32 %v1579, 1.442695
        %v1623 = vpow.pop %v1622
        %v1624 = vmul.f32 %v1580, 1.442695
        %v1625 = vpow.pop %v1624
        %v1626 = vmul.f32 %v1581, 1.442695
        %v1627 = vpow.pop %v1626
        %v1628 = vmul.f32 %v1582, 1.442695
        %v1629 = vpow.pop %v1628
        %v1630 = vmul.f32 %v1583, 1.442695
        %v1631 = vpow.pop %v1630
        %v1632 = vmul.f32 %v1584, 1.442695
        %v1633 = vpow.pop %v1632
        %v1634 = vmul.f32 %v1585, 1.442695
        %v1635 = vpow.pop %v1634
        %v1636 = vmul.f32 %v1586, 1.442695
        %v1637 = vpow.pop %v1636
        %v1638 = vmul.f32 %v1587, 1.442695
        %v1639 = vpow.pop %v1638
        %v1640 = vmul.f32 %v1588, 1.442695
        %v1641 = vpow.pop %v1640
        %v1642 = vmul.f32 %v1589, 1.442695
        %v1643 = vpow.pop %v1642
        %v1644 = vmul.f32 %v1590, 1.442695
        %v1645 = vpow.pop %v1644
        %v1646 = vmul.f32 %v1591, 1.442695
        %v1647 = vpow.pop %v1646
        %v1648 = vmul.f32 %v1592, 1.442695
        %v1649 = vpow.pop %v1648
        %v1650 = vmul.f32 %v1593, 1.442695
        %v1651 = vpow.pop %v1650
        %v1652 = vmul.f32 %v1594, 1.442695
        %v1653 = vpow.pop %v1652
        %v1654 = vmul.f32 %v1595, 1.442695
        %v1655 = vpow.pop %v1654
        %v1656 = vmul.f32 %v1596, 1.442695
        %v1657 = vpow.pop %v1656
        %v1658 = vmul.f32 %v1597, 1.442695
        %v1659 = vpow.pop %v1658
        %v1660 = vmul.f32 %v1598, 1.442695
        %v1661 = vpow.pop %v1660
        %v1662 = vmul.f32 %v1599, 1.442695
        %v1663 = vpow.pop %v1662
        %v1664 = vsel %vm1012, %v1601, 0.0
        %1665 = vadd.xlane.f32.xlu0 %v1664
        %v1666 = vpop.xlane.xlu0 %1665
        %v1667 = vsel %vm1012, %v1603, 0.0
        %1668 = vadd.xlane.f32.xlu0 %v1667
        %v1669 = vpop.xlane.xlu0 %1668
        %v1670 = vsel %vm1012, %v1605, 0.0
        %1671 = vadd.xlane.f32.xlu0 %v1670
        %v1672 = vpop.xlane.xlu0 %1671
        %v1673 = vsel %vm1012, %v1607, 0.0
        %1674 = vadd.xlane.f32.xlu0 %v1673
        %v1675 = vpop.xlane.xlu0 %1674
        %v1676 = vsel %vm1012, %v1609, 0.0
        %1677 = vadd.xlane.f32.xlu0 %v1676
        %v1678 = vpop.xlane.xlu0 %1677
        %v1679 = vsel %vm1012, %v1611, 0.0
        %1680 = vadd.xlane.f32.xlu0 %v1679
        %v1681 = vpop.xlane.xlu0 %1680
        %v1682 = vsel %vm1012, %v1613, 0.0
        %1683 = vadd.xlane.f32.xlu0 %v1682
        %v1684 = vpop.xlane.xlu0 %1683
        %v1685 = vsel %vm1012, %v1615, 0.0
        %1686 = vadd.xlane.f32.xlu0 %v1685
        %v1687 = vpop.xlane.xlu0 %1686
        %v1688 = vsel %vm1012, %v1617, 0.0
        %1689 = vadd.xlane.f32.xlu0 %v1688
        %v1690 = vpop.xlane.xlu0 %1689
        %v1691 = vsel %vm1012, %v1619, 0.0
        %1692 = vadd.xlane.f32.xlu0 %v1691
        %v1693 = vpop.xlane.xlu0 %1692
        %v1694 = vsel %vm1012, %v1621, 0.0
        %1695 = vadd.xlane.f32.xlu0 %v1694
        %v1696 = vpop.xlane.xlu0 %1695
        %v1697 = vsel %vm1012, %v1623, 0.0
        %1698 = vadd.xlane.f32.xlu0 %v1697
        %v1699 = vpop.xlane.xlu0 %1698
        %v1700 = vsel %vm1012, %v1625, 0.0
        %1701 = vadd.xlane.f32.xlu0 %v1700
        %v1702 = vpop.xlane.xlu0 %1701
        %v1703 = vsel %vm1012, %v1627, 0.0
        %1704 = vadd.xlane.f32.xlu0 %v1703
        %v1705 = vpop.xlane.xlu0 %1704
        %v1706 = vsel %vm1012, %v1629, 0.0
        %1707 = vadd.xlane.f32.xlu0 %v1706
        %v1708 = vpop.xlane.xlu0 %1707
        %v1709 = vsel %vm1012, %v1631, 0.0
        %1710 = vadd.xlane.f32.xlu0 %v1709
        %v1711 = vpop.xlane.xlu0 %1710
        %v1712 = vsel %vm1012, %v1633, 0.0
        %1713 = vadd.xlane.f32.xlu0 %v1712
        %v1714 = vpop.xlane.xlu0 %1713
        %v1715 = vsel %vm1012, %v1635, 0.0
        %1716 = vadd.xlane.f32.xlu0 %v1715
        %v1717 = vpop.xlane.xlu0 %1716
        %v1718 = vsel %vm1012, %v1637, 0.0
        %1719 = vadd.xlane.f32.xlu0 %v1718
        %v1720 = vpop.xlane.xlu0 %1719
        %v1721 = vsel %vm1012, %v1639, 0.0
        %1722 = vadd.xlane.f32.xlu0 %v1721
        %v1723 = vpop.xlane.xlu0 %1722
        %v1724 = vsel %vm1012, %v1641, 0.0
        %1725 = vadd.xlane.f32.xlu0 %v1724
        %v1726 = vpop.xlane.xlu0 %1725
        %v1727 = vsel %vm1012, %v1643, 0.0
        %1728 = vadd.xlane.f32.xlu0 %v1727
        %v1729 = vpop.xlane.xlu0 %1728
        %v1730 = vsel %vm1012, %v1645, 0.0
        %1731 = vadd.xlane.f32.xlu0 %v1730
        %v1732 = vpop.xlane.xlu0 %1731
        %v1733 = vsel %vm1012, %v1647, 0.0
        %1734 = vadd.xlane.f32.xlu0 %v1733
        %v1735 = vpop.xlane.xlu0 %1734
        %v1736 = vsel %vm1012, %v1649, 0.0
        %1737 = vadd.xlane.f32.xlu0 %v1736
        %v1738 = vpop.xlane.xlu0 %1737
        %v1739 = vsel %vm1012, %v1651, 0.0
        %1740 = vadd.xlane.f32.xlu0 %v1739
        %v1741 = vpop.xlane.xlu0 %1740
        %v1742 = vsel %vm1012, %v1653, 0.0
        %1743 = vadd.xlane.f32.xlu0 %v1742
        %v1744 = vpop.xlane.xlu0 %1743
        %v1745 = vsel %vm1012, %v1655, 0.0
        %1746 = vadd.xlane.f32.xlu0 %v1745
        %v1747 = vpop.xlane.xlu0 %1746
        %v1748 = vsel %vm1012, %v1657, 0.0
        %1749 = vadd.xlane.f32.xlu0 %v1748
        %v1750 = vpop.xlane.xlu0 %1749
        %v1751 = vsel %vm1012, %v1659, 0.0
        %1752 = vadd.xlane.f32.xlu0 %v1751
        %v1753 = vpop.xlane.xlu0 %1752
        %v1754 = vsel %vm1012, %v1661, 0.0
        %1755 = vadd.xlane.f32.xlu0 %v1754
        %v1756 = vpop.xlane.xlu0 %1755
        %v1757 = vsel %vm1012, %v1663, 0.0
        %1758 = vadd.xlane.f32.xlu0 %v1757
        %v1759 = vpop.xlane.xlu0 %1758
        %v1760 = vrcp.pop %v1666
        %v1761 = vrcp.pop %v1669
        %v1762 = vrcp.pop %v1672
        %v1763 = vrcp.pop %v1675
        %v1764 = vrcp.pop %v1678
        %v1765 = vrcp.pop %v1681
        %v1766 = vrcp.pop %v1684
        %v1767 = vrcp.pop %v1687
        %v1768 = vrcp.pop %v1690
        %v1769 = vrcp.pop %v1693
        %v1770 = vrcp.pop %v1696
        %v1771 = vrcp.pop %v1699
        %v1772 = vrcp.pop %v1702
        %v1773 = vrcp.pop %v1705
        %v1774 = vrcp.pop %v1708
        %v1775 = vrcp.pop %v1711
        %v1776 = vrcp.pop %v1714
        %v1777 = vrcp.pop %v1717
        %v1778 = vrcp.pop %v1720
        %v1779 = vrcp.pop %v1723
        %v1780 = vrcp.pop %v1726
        %v1781 = vrcp.pop %v1729
        %v1782 = vrcp.pop %v1732
        %v1783 = vrcp.pop %v1735
        %v1784 = vrcp.pop %v1738
        %v1785 = vrcp.pop %v1741
        %v1786 = vrcp.pop %v1744
        %v1787 = vrcp.pop %v1747
        %v1788 = vrcp.pop %v1750
        %v1789 = vrcp.pop %v1753
        %v1790 = vrcp.pop %v1756
        %v1791 = vrcp.pop %v1759
        %v1792 = vmul.f32 %v1601, %v1760
        %v1793 = vmul.f32 %v1603, %v1761
        %v1794 = vmul.f32 %v1605, %v1762
        %v1795 = vmul.f32 %v1607, %v1763
        %v1796 = vmul.f32 %v1609, %v1764
        %v1797 = vmul.f32 %v1611, %v1765
        %v1798 = vmul.f32 %v1613, %v1766
        %v1799 = vmul.f32 %v1615, %v1767
        %v1800 = vmul.f32 %v1617, %v1768
        %v1801 = vmul.f32 %v1619, %v1769
        %v1802 = vmul.f32 %v1621, %v1770
        %v1803 = vmul.f32 %v1623, %v1771
        %v1804 = vmul.f32 %v1625, %v1772
        %v1805 = vmul.f32 %v1627, %v1773
        %v1806 = vmul.f32 %v1629, %v1774
        %v1807 = vmul.f32 %v1631, %v1775
        %v1808 = vmul.f32 %v1633, %v1776
        %v1809 = vmul.f32 %v1635, %v1777
        %v1810 = vmul.f32 %v1637, %v1778
        %v1811 = vmul.f32 %v1639, %v1779
        %v1812 = vmul.f32 %v1641, %v1780
        %v1813 = vmul.f32 %v1643, %v1781
        %v1814 = vmul.f32 %v1645, %v1782
        %v1815 = vmul.f32 %v1647, %v1783
        %v1816 = vmul.f32 %v1649, %v1784
        %v1817 = vmul.f32 %v1651, %v1785
        %v1818 = vmul.f32 %v1653, %v1786
        %v1819 = vmul.f32 %v1655, %v1787
        %v1820 = vmul.f32 %v1657, %v1788
        %v1821 = vmul.f32 %v1659, %v1789
        %v1822 = vmul.f32 %v1661, %v1790
        %v1823 = vmul.f32 %v1663, %v1791
        %v1824 = vpack.c.bf16 %v1793, %v1792
        %v1825 = vpack.c.bf16 %v1795, %v1794
        %v1826 = vpack.c.bf16 %v1797, %v1796
        %v1827 = vpack.c.bf16 %v1799, %v1798
        %v1828 = vpack.c.bf16 %v1801, %v1800
        %v1829 = vpack.c.bf16 %v1803, %v1802
        %v1830 = vpack.c.bf16 %v1805, %v1804
        %v1831 = vpack.c.bf16 %v1807, %v1806
        %v1832 = vpack.c.bf16 %v1809, %v1808
        %v1833 = vpack.c.bf16 %v1811, %v1810
        %v1834 = vpack.c.bf16 %v1813, %v1812
        %v1835 = vpack.c.bf16 %v1815, %v1814
        %v1836 = vpack.c.bf16 %v1817, %v1816
        %v1837 = vpack.c.bf16 %v1819, %v1818
        %v1838 = vpack.c.bf16 %v1821, %v1820
        %v1839 = vpack.c.bf16 %v1823, %v1822
        %v1840 = vpack.c.bf16 %v832, %v828
        %v1841 = vpack.c.bf16 %v842, %v838
        %v1842 = vpack.c.bf16 %v852, %v848
        %v1843 = vpack.c.bf16 %v862, %v858
        %v1844 = vpack.c.bf16 %v872, %v868
        %v1845 = vpack.c.bf16 %v882, %v878
        %v1846 = vpack.c.bf16 %v892, %v888
        %v1847 = vpack.c.bf16 %v902, %v898
        %v1848 = vpack.c.bf16 %v912, %v908
        %v1849 = vpack.c.bf16 %v922, %v918
        %v1850 = vpack.c.bf16 %v932, %v928
        %v1851 = vpack.c.bf16 %v942, %v938
        %v1852 = vpack.c.bf16 %v952, %v948
        %v1853 = vpack.c.bf16 %v962, %v958
        %v1854 = vpack.c.bf16 %v972, %v968
        %v1855 = vpack.c.bf16 %v982, %v978
        %v1857 = vsel %vm1012, %v1824, 0
        %v1860 = vsel %vm1012, %v1825, 0
        %v1863 = vsel %vm1012, %v1826, 0
        %v1866 = vsel %vm1012, %v1827, 0
        %1868 = vmatprep.subr.bf16.mxu0 0
        %1869 = vmatpush1.bf16.msra.mxu0 0
        %1870 = vmatprep.subr.bf16.mxu0 0
        %1871 = vmatpush1.bf16.msra.mxu0 0
        %1872 = vmatprep.subr.bf16.mxu0 0
        %1873 = vmatpush1.bf16.msra.mxu0 0
        %1874 = vmatprep.subr.bf16.mxu0 0
        %1875 = vmatpush1.bf16.msra.mxu0 0
        %1876 = vmatprep.subr.bf16.mxu0 0
        %1877 = vmatpush1.bf16.msra.mxu0 %v1843
        %1878 = vmatprep.subr.bf16.mxu0 0
        %1879 = vmatpush1.bf16.msra.mxu0 %v1842
        %1880 = vmatprep.subr.bf16.mxu0 0
        %1881 = vmatpush1.bf16.msra.mxu0 %v1841
        %1882 = vmatprep.subr.bf16.mxu0 0
        %1883 = vmatpush1.bf16.msra.mxu0 %v1840
        %1884 = vmatprep.subr.bf16.mxu0 0
        %1885 = vmatpush2.bf16.msra.mxu0 0
        %1886 = vmatprep.subr.bf16.mxu0 0
        %1887 = vmatpush2.bf16.msra.mxu0 0
        %1888 = vmatprep.subr.bf16.mxu0 0
        %1889 = vmatpush2.bf16.msra.mxu0 0
        %1890 = vmatprep.subr.bf16.mxu0 0
        %1891 = vmatpush2.bf16.msra.mxu0 0
        %1892 = vmatprep.subr.bf16.mxu0 0
        %1893 = vmatpush2.bf16.msra.mxu0 0
        %1894 = vmatprep.subr.bf16.mxu0 0
        %1895 = vmatpush2.bf16.msra.mxu0 0
        %1896 = vmatprep.subr.bf16.mxu0 0
        %1897 = vmatpush2.bf16.msra.mxu0 0
        %1898 = vmatprep.subr.bf16.mxu0 0
        %1899 = vmatpush2.bf16.msra.mxu0 0
        %1900 = vmatprep.mubr.bf16.mxu0 0
        %1901 = vmatmul.mubr.bf16.gmra.mxu0 %v1857
        %v1902 = vpop.f32.mrf.mxu0
        %v1903 = vadd.f32 0.0, %v1902
        %v1904 = vpop.f32.mrf.mxu0
        %v1905 = vpop.f32.mrf.mxu0
        %v1906 = vadd.f32 0.0, %v1905
        %v1907 = vpop.f32.mrf.mxu0
        %1908 = vmatprep.mubr.bf16.mxu0 0
        %1909 = vmatmul.mubr.bf16.gmra.mxu0 %v1860
        %v1910 = vpop.f32.mrf.mxu0
        %v1911 = vadd.f32 0.0, %v1910
        %v1912 = vpop.f32.mrf.mxu0
        %v1913 = vpop.f32.mrf.mxu0
        %v1914 = vadd.f32 0.0, %v1913
        %v1915 = vpop.f32.mrf.mxu0
        %1916 = vmatprep.mubr.bf16.mxu0 0
        %1917 = vmatmul.mubr.bf16.gmra.mxu0 %v1863
        %v1918 = vpop.f32.mrf.mxu0
        %v1919 = vadd.f32 0.0, %v1918
        %v1920 = vpop.f32.mrf.mxu0
        %v1921 = vpop.f32.mrf.mxu0
        %v1922 = vadd.f32 0.0, %v1921
        %v1923 = vpop.f32.mrf.mxu0
        %1924 = vmatprep.mubr.bf16.mxu0 0
        %1925 = vmatmul.mubr.bf16.gmra.mxu0 %v1866
        %v1926 = vpop.f32.mrf.mxu0
        %v1927 = vadd.f32 0.0, %v1926
        %v1928 = vpop.f32.mrf.mxu0
        %v1929 = vpop.f32.mrf.mxu0
        %v1930 = vadd.f32 0.0, %v1929
        %v1931 = vpop.f32.mrf.mxu0
        %1932 = vdwg.mxu0
        %v1934 = vsel %vm1012, %v1828, 0
        %v1937 = vsel %vm1012, %v1829, 0
        %v1940 = vsel %vm1012, %v1830, 0
        %v1943 = vsel %vm1012, %v1831, 0
        %1945 = vmatprep.subr.bf16.mxu0 0
        %1946 = vmatpush1.bf16.msra.mxu0 0
        %1947 = vmatprep.subr.bf16.mxu0 0
        %1948 = vmatpush1.bf16.msra.mxu0 0
        %1949 = vmatprep.subr.bf16.mxu0 0
        %1950 = vmatpush1.bf16.msra.mxu0 0
        %1951 = vmatprep.subr.bf16.mxu0 0
        %1952 = vmatpush1.bf16.msra.mxu0 0
        %1953 = vmatprep.subr.bf16.mxu0 0
        %1954 = vmatpush1.bf16.msra.mxu0 %v1847
        %1955 = vmatprep.subr.bf16.mxu0 0
        %1956 = vmatpush1.bf16.msra.mxu0 %v1846
        %1957 = vmatprep.subr.bf16.mxu0 0
        %1958 = vmatpush1.bf16.msra.mxu0 %v1845
        %1959 = vmatprep.subr.bf16.mxu0 0
        %1960 = vmatpush1.bf16.msra.mxu0 %v1844
        %1961 = vmatprep.subr.bf16.mxu0 0
        %1962 = vmatpush2.bf16.msra.mxu0 0
        %1963 = vmatprep.subr.bf16.mxu0 0
        %1964 = vmatpush2.bf16.msra.mxu0 0
        %1965 = vmatprep.subr.bf16.mxu0 0
        %1966 = vmatpush2.bf16.msra.mxu0 0
        %1967 = vmatprep.subr.bf16.mxu0 0
        %1968 = vmatpush2.bf16.msra.mxu0 0
        %1969 = vmatprep.subr.bf16.mxu0 0
        %1970 = vmatpush2.bf16.msra.mxu0 0
        %1971 = vmatprep.subr.bf16.mxu0 0
        %1972 = vmatpush2.bf16.msra.mxu0 0
        %1973 = vmatprep.subr.bf16.mxu0 0
        %1974 = vmatpush2.bf16.msra.mxu0 0
        %1975 = vmatprep.subr.bf16.mxu0 0
        %1976 = vmatpush2.bf16.msra.mxu0 0
        %1977 = vmatprep.mubr.bf16.mxu0 0
        %1978 = vmatmul.mubr.bf16.gmra.mxu0 %v1934
        %v1979 = vpop.f32.mrf.mxu0
        %v1980 = vadd.f32 0.0, %v1979
        %v1981 = vpop.f32.mrf.mxu0
        %v1982 = vpop.f32.mrf.mxu0
        %v1983 = vadd.f32 0.0, %v1982
        %v1984 = vpop.f32.mrf.mxu0
        %1985 = vmatprep.mubr.bf16.mxu0 0
        %1986 = vmatmul.mubr.bf16.gmra.mxu0 %v1937
        %v1987 = vpop.f32.mrf.mxu0
        %v1988 = vadd.f32 0.0, %v1987
        %v1989 = vpop.f32.mrf.mxu0
        %v1990 = vpop.f32.mrf.mxu0
        %v1991 = vadd.f32 0.0, %v1990
        %v1992 = vpop.f32.mrf.mxu0
        %1993 = vmatprep.mubr.bf16.mxu0 0
        %1994 = vmatmul.mubr.bf16.gmra.mxu0 %v1940
        %v1995 = vpop.f32.mrf.mxu0
        %v1996 = vadd.f32 0.0, %v1995
        %v1997 = vpop.f32.mrf.mxu0
        %v1998 = vpop.f32.mrf.mxu0
        %v1999 = vadd.f32 0.0, %v1998
        %v2000 = vpop.f32.mrf.mxu0
        %2001 = vmatprep.mubr.bf16.mxu0 0
        %2002 = vmatmul.mubr.bf16.gmra.mxu0 %v1943
        %v2003 = vpop.f32.mrf.mxu0
        %v2004 = vadd.f32 0.0, %v2003
        %v2005 = vpop.f32.mrf.mxu0
        %v2006 = vpop.f32.mrf.mxu0
        %v2007 = vadd.f32 0.0, %v2006
        %v2008 = vpop.f32.mrf.mxu0
        %2009 = vdwg.mxu0
        %v2011 = vsel %vm1012, %v1832, 0
        %v2014 = vsel %vm1012, %v1833, 0
        %v2017 = vsel %vm1012, %v1834, 0
        %v2020 = vsel %vm1012, %v1835, 0
        %2022 = vmatprep.subr.bf16.mxu0 0
        %2023 = vmatpush1.bf16.msra.mxu0 0
        %2024 = vmatprep.subr.bf16.mxu0 0
        %2025 = vmatpush1.bf16.msra.mxu0 0
        %2026 = vmatprep.subr.bf16.mxu0 0
        %2027 = vmatpush1.bf16.msra.mxu0 0
        %2028 = vmatprep.subr.bf16.mxu0 0
        %2029 = vmatpush1.bf16.msra.mxu0 0
        %2030 = vmatprep.subr.bf16.mxu0 0
        %2031 = vmatpush1.bf16.msra.mxu0 %v1851
        %2032 = vmatprep.subr.bf16.mxu0 0
        %2033 = vmatpush1.bf16.msra.mxu0 %v1850
        %2034 = vmatprep.subr.bf16.mxu0 0
        %2035 = vmatpush1.bf16.msra.mxu0 %v1849
        %2036 = vmatprep.subr.bf16.mxu0 0
        %2037 = vmatpush1.bf16.msra.mxu0 %v1848
        %2038 = vmatprep.subr.bf16.mxu0 0
        %2039 = vmatpush2.bf16.msra.mxu0 0
        %2040 = vmatprep.subr.bf16.mxu0 0
        %2041 = vmatpush2.bf16.msra.mxu0 0
        %2042 = vmatprep.subr.bf16.mxu0 0
        %2043 = vmatpush2.bf16.msra.mxu0 0
        %2044 = vmatprep.subr.bf16.mxu0 0
        %2045 = vmatpush2.bf16.msra.mxu0 0
        %2046 = vmatprep.subr.bf16.mxu0 0
        %2047 = vmatpush2.bf16.msra.mxu0 0
        %2048 = vmatprep.subr.bf16.mxu0 0
        %2049 = vmatpush2.bf16.msra.mxu0 0
        %2050 = vmatprep.subr.bf16.mxu0 0
        %2051 = vmatpush2.bf16.msra.mxu0 0
        %2052 = vmatprep.subr.bf16.mxu0 0
        %2053 = vmatpush2.bf16.msra.mxu0 0
        %2054 = vmatprep.mubr.bf16.mxu0 0
        %2055 = vmatmul.mubr.bf16.gmra.mxu0 %v2011
        %v2056 = vpop.f32.mrf.mxu0
        %v2057 = vadd.f32 0.0, %v2056
        %v2058 = vpop.f32.mrf.mxu0
        %v2059 = vpop.f32.mrf.mxu0
        %v2060 = vadd.f32 0.0, %v2059
        %v2061 = vpop.f32.mrf.mxu0
        %2062 = vmatprep.mubr.bf16.mxu0 0
        %2063 = vmatmul.mubr.bf16.gmra.mxu0 %v2014
        %v2064 = vpop.f32.mrf.mxu0
        %v2065 = vadd.f32 0.0, %v2064
        %v2066 = vpop.f32.mrf.mxu0
        %v2067 = vpop.f32.mrf.mxu0
        %v2068 = vadd.f32 0.0, %v2067
        %v2069 = vpop.f32.mrf.mxu0
        %2070 = vmatprep.mubr.bf16.mxu0 0
        %2071 = vmatmul.mubr.bf16.gmra.mxu0 %v2017
        %v2072 = vpop.f32.mrf.mxu0
        %v2073 = vadd.f32 0.0, %v2072
        %v2074 = vpop.f32.mrf.mxu0
        %v2075 = vpop.f32.mrf.mxu0
        %v2076 = vadd.f32 0.0, %v2075
        %v2077 = vpop.f32.mrf.mxu0
        %2078 = vmatprep.mubr.bf16.mxu0 0
        %2079 = vmatmul.mubr.bf16.gmra.mxu0 %v2020
        %v2080 = vpop.f32.mrf.mxu0
        %v2081 = vadd.f32 0.0, %v2080
        %v2082 = vpop.f32.mrf.mxu0
        %v2083 = vpop.f32.mrf.mxu0
        %v2084 = vadd.f32 0.0, %v2083
        %v2085 = vpop.f32.mrf.mxu0
        %2086 = vdwg.mxu0
        %v2088 = vsel %vm1012, %v1836, 0
        %v2091 = vsel %vm1012, %v1837, 0
        %v2094 = vsel %vm1012, %v1838, 0
        %v2097 = vsel %vm1012, %v1839, 0
        %2099 = vmatprep.subr.bf16.mxu0 0
        %2100 = vmatpush1.bf16.msra.mxu0 0
        %2101 = vmatprep.subr.bf16.mxu0 0
        %2102 = vmatpush1.bf16.msra.mxu0 0
        %2103 = vmatprep.subr.bf16.mxu0 0
        %2104 = vmatpush1.bf16.msra.mxu0 0
        %2105 = vmatprep.subr.bf16.mxu0 0
        %2106 = vmatpush1.bf16.msra.mxu0 0
        %2107 = vmatprep.subr.bf16.mxu0 0
        %2108 = vmatpush1.bf16.msra.mxu0 %v1855
        %2109 = vmatprep.subr.bf16.mxu0 0
        %2110 = vmatpush1.bf16.msra.mxu0 %v1854
        %2111 = vmatprep.subr.bf16.mxu0 0
        %2112 = vmatpush1.bf16.msra.mxu0 %v1853
        %2113 = vmatprep.subr.bf16.mxu0 0
        %2114 = vmatpush1.bf16.msra.mxu0 %v1852
        %2115 = vmatprep.subr.bf16.mxu0 0
        %2116 = vmatpush2.bf16.msra.mxu0 0
        %2117 = vmatprep.subr.bf16.mxu0 0
        %2118 = vmatpush2.bf16.msra.mxu0 0
        %2119 = vmatprep.subr.bf16.mxu0 0
        %2120 = vmatpush2.bf16.msra.mxu0 0
        %2121 = vmatprep.subr.bf16.mxu0 0
        %2122 = vmatpush2.bf16.msra.mxu0 0
        %2123 = vmatprep.subr.bf16.mxu0 0
        %2124 = vmatpush2.bf16.msra.mxu0 0
        %2125 = vmatprep.subr.bf16.mxu0 0
        %2126 = vmatpush2.bf16.msra.mxu0 0
        %2127 = vmatprep.subr.bf16.mxu0 0
        %2128 = vmatpush2.bf16.msra.mxu0 0
        %2129 = vmatprep.subr.bf16.mxu0 0
        %2130 = vmatpush2.bf16.msra.mxu0 0
        %2131 = vmatprep.mubr.bf16.mxu0 0
        %2132 = vmatmul.mubr.bf16.gmra.mxu0 %v2088
        %v2133 = vpop.f32.mrf.mxu0
        %v2134 = vadd.f32 0.0, %v2133
        %v2135 = vpop.f32.mrf.mxu0
        %v2136 = vpop.f32.mrf.mxu0
        %v2137 = vadd.f32 0.0, %v2136
        %v2138 = vpop.f32.mrf.mxu0
        %2139 = vmatprep.mubr.bf16.mxu0 0
        %2140 = vmatmul.mubr.bf16.gmra.mxu0 %v2091
        %v2141 = vpop.f32.mrf.mxu0
        %v2142 = vadd.f32 0.0, %v2141
        %v2143 = vpop.f32.mrf.mxu0
        %v2144 = vpop.f32.mrf.mxu0
        %v2145 = vadd.f32 0.0, %v2144
        %v2146 = vpop.f32.mrf.mxu0
        %2147 = vmatprep.mubr.bf16.mxu0 0
        %2148 = vmatmul.mubr.bf16.gmra.mxu0 %v2094
        %v2149 = vpop.f32.mrf.mxu0
        %v2150 = vadd.f32 0.0, %v2149
        %v2151 = vpop.f32.mrf.mxu0
        %v2152 = vpop.f32.mrf.mxu0
        %v2153 = vadd.f32 0.0, %v2152
        %v2154 = vpop.f32.mrf.mxu0
        %2155 = vmatprep.mubr.bf16.mxu0 0
        %2156 = vmatmul.mubr.bf16.gmra.mxu0 %v2097
        %v2157 = vpop.f32.mrf.mxu0
        %v2158 = vadd.f32 0.0, %v2157
        %v2159 = vpop.f32.mrf.mxu0
        %v2160 = vpop.f32.mrf.mxu0
        %v2161 = vadd.f32 0.0, %v2160
        %v2162 = vpop.f32.mrf.mxu0
        %2163 = vdwg.mxu0
        %2164 = vst.msk [vmem:[%s162] sm:$0xff] %vm1012, %v1903
        %2165 = vst.msk [vmem:[%s162 + $0x8] sm:$0xff] %vm1012, %v1906
        %2166 = vst.msk [vmem:[%s162 + $0x10] sm:$0xff] %vm1012, %v1911
        %2167 = vst.msk [vmem:[%s162 + $0x18] sm:$0xff] %vm1012, %v1914
        %2168 = vst.msk [vmem:[%s162 + $0x20] sm:$0xff] %vm1012, %v1919
        %2169 = vst.msk [vmem:[%s162 + $0x28] sm:$0xff] %vm1012, %v1922
        %2170 = vst.msk [vmem:[%s162 + $0x30] sm:$0xff] %vm1012, %v1927
        %2171 = vst.msk [vmem:[%s162 + $0x38] sm:$0xff] %vm1012, %v1930
        %2172 = vst.msk [vmem:[%s162 + $0x40] sm:$0xff] %vm1012, %v1980
        %2173 = vst.msk [vmem:[%s162 + $0x48] sm:$0xff] %vm1012, %v1983
        %2174 = vst.msk [vmem:[%s162 + $0x50] sm:$0xff] %vm1012, %v1988
        %2175 = vst.msk [vmem:[%s162 + $0x58] sm:$0xff] %vm1012, %v1991
        %2176 = vst.msk [vmem:[%s162 + $0x60] sm:$0xff] %vm1012, %v1996
        %2177 = vst.msk [vmem:[%s162 + $0x68] sm:$0xff] %vm1012, %v1999
        %2178 = vst.msk [vmem:[%s162 + $0x70] sm:$0xff] %vm1012, %v2004
        %2179 = vst.msk [vmem:[%s162 + $0x78] sm:$0xff] %vm1012, %v2007
        %2180 = vst.msk [vmem:[%s162 + $0x80] sm:$0xff] %vm1012, %v2057
        %2181 = vst.msk [vmem:[%s162 + $0x88] sm:$0xff] %vm1012, %v2060
        %2182 = vst.msk [vmem:[%s162 + $0x90] sm:$0xff] %vm1012, %v2065
        %2183 = vst.msk [vmem:[%s162 + $0x98] sm:$0xff] %vm1012, %v2068
        %2184 = vst.msk [vmem:[%s162 + $0xa0] sm:$0xff] %vm1012, %v2073
        %2185 = vst.msk [vmem:[%s162 + $0xa8] sm:$0xff] %vm1012, %v2076
        %2186 = vst.msk [vmem:[%s162 + $0xb0] sm:$0xff] %vm1012, %v2081
        %2187 = vst.msk [vmem:[%s162 + $0xb8] sm:$0xff] %vm1012, %v2084
        %2188 = vst.msk [vmem:[%s162 + $0xc0] sm:$0xff] %vm1012, %v2134
        %2189 = vst.msk [vmem:[%s162 + $0xc8] sm:$0xff] %vm1012, %v2137
        %2190 = vst.msk [vmem:[%s162 + $0xd0] sm:$0xff] %vm1012, %v2142
        %2191 = vst.msk [vmem:[%s162 + $0xd8] sm:$0xff] %vm1012, %v2145
        %2192 = vst.msk [vmem:[%s162 + $0xe0] sm:$0xff] %vm1012, %v2150
        %2193 = vst.msk [vmem:[%s162 + $0xe8] sm:$0xff] %vm1012, %v2153
        %2194 = vst.msk [vmem:[%s162 + $0xf0] sm:$0xff] %vm1012, %v2158
        %2195 = vst.msk [vmem:[%s162 + $0xf8] sm:$0xff] %vm1012, %v2161
        %s2196 = sand.u32 %s74, 1
        %s2197 = scalar_lea.sflag [#allocation4], %s2196
        %s2198 = sand.u32 %s74, 1
        %s2199 = smul.addr %s2198, 256
        %s2200 = scalar_lea.vmem [#allocation5], %s2199
        // Predicated region
        $region33: #{tpu_custom_call.1} parent=27 // pred_check
          %p2201 = pneg %p84
        $region34: #{tpu_custom_call.1} parent=27 // pred_check_branch
          %2203 = sbr.rel (%p2201) target = $region36
        $region35: #{tpu_custom_call.1} parent=27 // pred_region
          %s2204 = smul.u32 4, %s19
          %s2206 = ssub.s32 4096, 4096
          %2207 = vsyncadd %s2197, %s2206
          %s2208 = smul.addr %s2204, 8
          %s2209 = smul.addr %s2208, 128
          %s2210 = scalar_lea.hbm %s2, %s2209
          %s2211 = sshll.u32 %s2200, 4
          %s2212 = int_to_ptr.vmem [resolvable:$true] %s2211
          %2217 = dma.vmem_to_hbm [thread:$0]  %s2212, 4096, %s2210, %s2197, 128, 128, 8
        $region36: #{tpu_custom_call.1} parent=27 // pred_fallthru
          _
      $region28: #{tpu_custom_call.1} parent=5 // pred_fallthru
        _
      %p2218 = scmp.le.s32.totalorder 2, %s14
      // Predicated region
      $region37: #{tpu_custom_call.1} parent=5 // pred_check
        %p2219 = pneg %p2218
      $region38: #{tpu_custom_call.1} parent=5 // pred_check_branch
        %2221 = sbr.rel (%p2219) target = $region40
      $region39: #{tpu_custom_call.1} parent=5 // pred_region
        %s2222 = ssub.s32 %s14, 2
        // Predicated region
        $region41: #{tpu_custom_call.1} parent=39 // pred_check
          %p2223 = pneg %p90
        $region42: #{tpu_custom_call.1} parent=39 // pred_check_branch
          %2225 = sbr.rel (%p2223) target = $region44
        $region43: #{tpu_custom_call.1} parent=39 // pred_region
          %s2226 = sand.u32 %s75, 1
          %s2227 = scalar_lea.sflag [#allocation4], %s2226
          %s2228 = sand.u32 %s75, 1
          %s2229 = smul.addr %s2228, 256
          %s2230 = scalar_lea.vmem [#allocation5], %s2229
          %2231 = dma.done %s2227, 4096
        $region44: #{tpu_custom_call.1} parent=39 // pred_fallthru
          _
      $region40: #{tpu_custom_call.1} parent=5 // pred_fallthru
        _
    $region6: #{tpu_custom_call.1} parent=1 // loop_footer
      %s18 = sadd.s32 1, %s14
    $region7: #{tpu_custom_call.1} parent=1 // loop_footer_branch
      %13 = sbr.rel target = $region3
    $region8: #{tpu_custom_call.1} parent=1 // loop_exit
      _
    %2232 = vsyncpa [#allocation3], 1
    %s2233 = scalar_lea.sflag [#allocation3], 1
    %2234 = vsyncpa %s2233, 1
    %2235 = vsyncpa [#allocation4], 1
    %s2236 = scalar_lea.sflag [#allocation4], 1
    %2237 = vsyncpa %s2236, 1

</llo_original>
